<compile_context>
chip_gen: v6e
topology: v6e:2x2x1
jax: 0.10.0
libtpu: 0.0.40
codegen_flags: <defaults>
</compile_context>

<pallas_src>
import jax
import jax.numpy as jnp
from jax.experimental import pallas as pl
from jax.experimental.pallas import tpu as pltpu


def _transpose_relu_kernel(x_ref, y_ref, z_ref, xo_ref, yo_ref, zo_ref):
    # x: (A, B) -> (B, A)   last-two-dim swap (XLU) + relu (VPU).
    xo_ref[...] = jnp.maximum(jnp.swapaxes(x_ref[...], 0, 1), 0.0)

    # y: (A, B, C) -> (A, C, B)   batched last-two-dim swap (XLU) + relu.
    yo_ref[...] = jnp.maximum(jnp.swapaxes(y_ref[...], 1, 2), 0.0)

    # z: (A, B, C, D) -> (C, B, A, D)
    # Lane dim D is untouched by the permutation, so zo[c, b] is exactly the
    # slice z[:, b, c, :].  Hoist one contiguous (A, C, D) slab load + relu
    # per b, then emit one whole-(A, D)-tile store per (c, b) pair — no
    # cross-lane transpose, no strided single-sublane loads, no masked
    # per-row stores.
    _, B, C, _ = z_ref.shape
    for b in range(B):
        zb = jnp.maximum(z_ref[:, b, :, :], 0.0)      # (A, C, D) slab
        for c in range(C):
            zo_ref[c, b, :, :] = zb[:, c, :]          # full (A, D) tile store


def transpose_relu(x, y, z):
    A2, B2 = x.shape
    A3, B3, C3 = y.shape
    A4, B4, C4, D4 = z.shape

    out_shapes = (
        jax.ShapeDtypeStruct((B2, A2), x.dtype),
        jax.ShapeDtypeStruct((A3, C3, B3), y.dtype),
        jax.ShapeDtypeStruct((C4, B4, A4, D4), z.dtype),
    )

    vmem = pl.BlockSpec(memory_space=pltpu.MemorySpace.VMEM)

    return pl.pallas_call(
        _transpose_relu_kernel,
        out_shape=out_shapes,
        in_specs=[vmem, vmem, vmem],
        out_specs=(vmem, vmem, vmem),
    )(x, y, z)


if __name__ == "__main__":
    key = jax.random.PRNGKey(0)
    kx, ky, kz = jax.random.split(key, 3)

    # Small shapes consistent with the pnnx test (fit trivially in VMEM).
    x = jax.random.normal(kx, (3, 16), dtype=jnp.float32)
    y = jax.random.normal(ky, (5, 9, 11), dtype=jnp.float32)
    z = jax.random.normal(kz, (8, 5, 9, 10), dtype=jnp.float32)

    xo, yo, zo = jax.block_until_ready(transpose_relu(x, y, z))

    # Reference check (plain JAX).
    xr = jnp.maximum(jnp.swapaxes(x, 0, 1), 0.0)
    yr = jnp.maximum(jnp.swapaxes(y, 1, 2), 0.0)
    zr = jnp.maximum(jnp.swapaxes(z, 0, 2), 0.0)
    assert xo.shape == xr.shape and yo.shape == yr.shape and zo.shape == zr.shape
    assert jnp.allclose(xo, xr) and jnp.allclose(yo, yr) and jnp.allclose(zo, zr)

    print("KERNEL_OK")
</pallas_src>

<mosaic_0001>
module attributes {stable_mosaic.version = 11 : i64} {
  func.func @_transpose_relu_kernel(%arg0: memref<3x16xf32, #tpu.memory_space<vmem>>, %arg1: memref<5x9x11xf32, #tpu.memory_space<vmem>>, %arg2: memref<8x5x9x10xf32, #tpu.memory_space<vmem>>, %arg3: memref<16x3xf32, #tpu.memory_space<vmem>>, %arg4: memref<5x11x9xf32, #tpu.memory_space<vmem>>, %arg5: memref<9x5x8x10xf32, #tpu.memory_space<vmem>>) attributes {dimension_semantics = [], scalar_prefetch = 0 : i64, scratch_operands = 0 : i64, tpu.core_type = #tpu.core_type<tc>} {
    %c0 = arith.constant 0 : index
    %c0_0 = arith.constant 0 : index
    %0 = vector.load %arg0[%c0, %c0_0] : memref<3x16xf32, #tpu.memory_space<vmem>>, vector<3x16xf32>
    %1 = tpu.transpose %0, [1, 0] : vector<3x16xf32> -> vector<16x3xf32>
    %cst = arith.constant 0.000000e+00 : f32
    %2 = vector.broadcast %cst : f32 to vector<16x3xf32>
    %3 = arith.maximumf %1, %2 : vector<16x3xf32>
    %c0_1 = arith.constant 0 : index
    %c0_2 = arith.constant 0 : index
    %4 = vector.load %arg3[%c0_1, %c0_2] : memref<16x3xf32, #tpu.memory_space<vmem>>, vector<16x3xf32>
    tpu.vector_store %arg3[%c0_1, %c0_2], %3 {strides = array<i32>} : memref<16x3xf32, #tpu.memory_space<vmem>>, vector<16x3xf32>,
    %c0_3 = arith.constant 0 : index
    %c0_4 = arith.constant 0 : index
    %c0_5 = arith.constant 0 : index
    %5 = vector.load %arg1[%c0_3, %c0_4, %c0_5] : memref<5x9x11xf32, #tpu.memory_space<vmem>>, vector<5x9x11xf32>
    %6 = tpu.transpose %5, [0, 2, 1] : vector<5x9x11xf32> -> vector<5x11x9xf32>
    %cst_6 = arith.constant 0.000000e+00 : f32
    %7 = vector.broadcast %cst_6 : f32 to vector<5x11x9xf32>
    %8 = arith.maximumf %6, %7 : vector<5x11x9xf32>
    %c0_7 = arith.constant 0 : index
    %c0_8 = arith.constant 0 : index
    %c0_9 = arith.constant 0 : index
    %9 = vector.load %arg4[%c0_7, %c0_8, %c0_9] : memref<5x11x9xf32, #tpu.memory_space<vmem>>, vector<5x11x9xf32>
    tpu.vector_store %arg4[%c0_7, %c0_8, %c0_9], %8 {strides = array<i32>} : memref<5x11x9xf32, #tpu.memory_space<vmem>>, vector<5x11x9xf32>,
    %c0_10 = arith.constant 0 : index
    %c0_11 = arith.constant 0 : index
    %c0_12 = arith.constant 0 : index
    %c0_13 = arith.constant 0 : index
    %10 = vector.load %arg2[%c0_10, %c0_11, %c0_12, %c0_13] : memref<8x5x9x10xf32, #tpu.memory_space<vmem>>, vector<8x1x9x10xf32>
    %11 = vector.shape_cast %10 : vector<8x1x9x10xf32> to vector<8x9x10xf32>
    %cst_14 = arith.constant 0.000000e+00 : f32
    %12 = vector.broadcast %cst_14 : f32 to vector<8x9x10xf32>
    %13 = arith.maximumf %11, %12 : vector<8x9x10xf32>
    %14 = vector.extract_strided_slice %13 {offsets = [0, 0, 0], sizes = [8, 1, 10], strides = [1, 1, 1]} : vector<8x9x10xf32> to vector<8x1x10xf32>
    %15 = vector.shape_cast %14 : vector<8x1x10xf32> to vector<8x10xf32>
    %c0_15 = arith.constant 0 : index
    %c0_16 = arith.constant 0 : index
    %c0_17 = arith.constant 0 : index
    %c0_18 = arith.constant 0 : index
    %16 = vector.load %arg5[%c0_15, %c0_16, %c0_17, %c0_18] : memref<9x5x8x10xf32, #tpu.memory_space<vmem>>, vector<1x1x8x10xf32>
    %17 = vector.shape_cast %16 : vector<1x1x8x10xf32> to vector<8x10xf32>
    %18 = vector.shape_cast %15 : vector<8x10xf32> to vector<1x1x8x10xf32>
    tpu.vector_store %arg5[%c0_15, %c0_16, %c0_17, %c0_18], %18 {strides = array<i32>} : memref<9x5x8x10xf32, #tpu.memory_space<vmem>>, vector<1x1x8x10xf32>,
    %19 = vector.extract_strided_slice %13 {offsets = [0, 1, 0], sizes = [8, 1, 10], strides = [1, 1, 1]} : vector<8x9x10xf32> to vector<8x1x10xf32>
    %20 = vector.shape_cast %19 : vector<8x1x10xf32> to vector<8x10xf32>
    %c1 = arith.constant 1 : index
    %c0_19 = arith.constant 0 : index
    %c0_20 = arith.constant 0 : index
    %c0_21 = arith.constant 0 : index
    %21 = vector.load %arg5[%c1, %c0_19, %c0_20, %c0_21] : memref<9x5x8x10xf32, #tpu.memory_space<vmem>>, vector<1x1x8x10xf32>
    %22 = vector.shape_cast %21 : vector<1x1x8x10xf32> to vector<8x10xf32>
    %23 = vector.shape_cast %20 : vector<8x10xf32> to vector<1x1x8x10xf32>
    tpu.vector_store %arg5[%c1, %c0_19, %c0_20, %c0_21], %23 {strides = array<i32>} : memref<9x5x8x10xf32, #tpu.memory_space<vmem>>, vector<1x1x8x10xf32>,
    %24 = vector.extract_strided_slice %13 {offsets = [0, 2, 0], sizes = [8, 1, 10], strides = [1, 1, 1]} : vector<8x9x10xf32> to vector<8x1x10xf32>
    %25 = vector.shape_cast %24 : vector<8x1x10xf32> to vector<8x10xf32>
    %c2 = arith.constant 2 : index
    %c0_22 = arith.constant 0 : index
    %c0_23 = arith.constant 0 : index
    %c0_24 = arith.constant 0 : index
    %26 = vector.load %arg5[%c2, %c0_22, %c0_23, %c0_24] : memref<9x5x8x10xf32, #tpu.memory_space<vmem>>, vector<1x1x8x10xf32>
    %27 = vector.shape_cast %26 : vector<1x1x8x10xf32> to vector<8x10xf32>
    %28 = vector.shape_cast %25 : vector<8x10xf32> to vector<1x1x8x10xf32>
    tpu.vector_store %arg5[%c2, %c0_22, %c0_23, %c0_24], %28 {strides = array<i32>} : memref<9x5x8x10xf32, #tpu.memory_space<vmem>>, vector<1x1x8x10xf32>,
    %29 = vector.extract_strided_slice %13 {offsets = [0, 3, 0], sizes = [8, 1, 10], strides = [1, 1, 1]} : vector<8x9x10xf32> to vector<8x1x10xf32>
    %30 = vector.shape_cast %29 : vector<8x1x10xf32> to vector<8x10xf32>
    %c3 = arith.constant 3 : index
    %c0_25 = arith.constant 0 : index
    %c0_26 = arith.constant 0 : index
    %c0_27 = arith.constant 0 : index
    %31 = vector.load %arg5[%c3, %c0_25, %c0_26, %c0_27] : memref<9x5x8x10xf32, #tpu.memory_space<vmem>>, vector<1x1x8x10xf32>
    %32 = vector.shape_cast %31 : vector<1x1x8x10xf32> to vector<8x10xf32>
    %33 = vector.shape_cast %30 : vector<8x10xf32> to vector<1x1x8x10xf32>
    tpu.vector_store %arg5[%c3, %c0_25, %c0_26, %c0_27], %33 {strides = array<i32>} : memref<9x5x8x10xf32, #tpu.memory_space<vmem>>, vector<1x1x8x10xf32>,
    %34 = vector.extract_strided_slice %13 {offsets = [0, 4, 0], sizes = [8, 1, 10], strides = [1, 1, 1]} : vector<8x9x10xf32> to vector<8x1x10xf32>
    %35 = vector.shape_cast %34 : vector<8x1x10xf32> to vector<8x10xf32>
    %c4 = arith.constant 4 : index
    %c0_28 = arith.constant 0 : index
    %c0_29 = arith.constant 0 : index
    %c0_30 = arith.constant 0 : index
    %36 = vector.load %arg5[%c4, %c0_28, %c0_29, %c0_30] : memref<9x5x8x10xf32, #tpu.memory_space<vmem>>, vector<1x1x8x10xf32>
    %37 = vector.shape_cast %36 : vector<1x1x8x10xf32> to vector<8x10xf32>
    %38 = vector.shape_cast %35 : vector<8x10xf32> to vector<1x1x8x10xf32>
    tpu.vector_store %arg5[%c4, %c0_28, %c0_29, %c0_30], %38 {strides = array<i32>} : memref<9x5x8x10xf32, #tpu.memory_space<vmem>>, vector<1x1x8x10xf32>,
    %39 = vector.extract_strided_slice %13 {offsets = [0, 5, 0], sizes = [8, 1, 10], strides = [1, 1, 1]} : vector<8x9x10xf32> to vector<8x1x10xf32>
    %40 = vector.shape_cast %39 : vector<8x1x10xf32> to vector<8x10xf32>
    %c5 = arith.constant 5 : index
    %c0_31 = arith.constant 0 : index
    %c0_32 = arith.constant 0 : index
    %c0_33 = arith.constant 0 : index
    %41 = vector.load %arg5[%c5, %c0_31, %c0_32, %c0_33] : memref<9x5x8x10xf32, #tpu.memory_space<vmem>>, vector<1x1x8x10xf32>
    %42 = vector.shape_cast %41 : vector<1x1x8x10xf32> to vector<8x10xf32>
    %43 = vector.shape_cast %40 : vector<8x10xf32> to vector<1x1x8x10xf32>
    tpu.vector_store %arg5[%c5, %c0_31, %c0_32, %c0_33], %43 {strides = array<i32>} : memref<9x5x8x10xf32, #tpu.memory_space<vmem>>, vector<1x1x8x10xf32>,
    %44 = vector.extract_strided_slice %13 {offsets = [0, 6, 0], sizes = [8, 1, 10], strides = [1, 1, 1]} : vector<8x9x10xf32> to vector<8x1x10xf32>
    %45 = vector.shape_cast %44 : vector<8x1x10xf32> to vector<8x10xf32>
    %c6 = arith.constant 6 : index
    %c0_34 = arith.constant 0 : index
    %c0_35 = arith.constant 0 : index
    %c0_36 = arith.constant 0 : index
    %46 = vector.load %arg5[%c6, %c0_34, %c0_35, %c0_36] : memref<9x5x8x10xf32, #tpu.memory_space<vmem>>, vector<1x1x8x10xf32>
    %47 = vector.shape_cast %46 : vector<1x1x8x10xf32> to vector<8x10xf32>
    %48 = vector.shape_cast %45 : vector<8x10xf32> to vector<1x1x8x10xf32>
    tpu.vector_store %arg5[%c6, %c0_34, %c0_35, %c0_36], %48 {strides = array<i32>} : memref<9x5x8x10xf32, #tpu.memory_space<vmem>>, vector<1x1x8x10xf32>,
    %49 = vector.extract_strided_slice %13 {offsets = [0, 7, 0], sizes = [8, 1, 10], strides = [1, 1, 1]} : vector<8x9x10xf32> to vector<8x1x10xf32>
    %50 = vector.shape_cast %49 : vector<8x1x10xf32> to vector<8x10xf32>
    %c7 = arith.constant 7 : index
    %c0_37 = arith.constant 0 : index
    %c0_38 = arith.constant 0 : index
    %c0_39 = arith.constant 0 : index
    %51 = vector.load %arg5[%c7, %c0_37, %c0_38, %c0_39] : memref<9x5x8x10xf32, #tpu.memory_space<vmem>>, vector<1x1x8x10xf32>
    %52 = vector.shape_cast %51 : vector<1x1x8x10xf32> to vector<8x10xf32>
    %53 = vector.shape_cast %50 : vector<8x10xf32> to vector<1x1x8x10xf32>
    tpu.vector_store %arg5[%c7, %c0_37, %c0_38, %c0_39], %53 {strides = array<i32>} : memref<9x5x8x10xf32, #tpu.memory_space<vmem>>, vector<1x1x8x10xf32>,
    %54 = vector.extract_strided_slice %13 {offsets = [0, 8, 0], sizes = [8, 1, 10], strides = [1, 1, 1]} : vector<8x9x10xf32> to vector<8x1x10xf32>
    %55 = vector.shape_cast %54 : vector<8x1x10xf32> to vector<8x10xf32>
    %c8 = arith.constant 8 : index
    %c0_40 = arith.constant 0 : index
    %c0_41 = arith.constant 0 : index
    %c0_42 = arith.constant 0 : index
    %56 = vector.load %arg5[%c8, %c0_40, %c0_41, %c0_42] : memref<9x5x8x10xf32, #tpu.memory_space<vmem>>, vector<1x1x8x10xf32>
    %57 = vector.shape_cast %56 : vector<1x1x8x10xf32> to vector<8x10xf32>
    %58 = vector.shape_cast %55 : vector<8x10xf32> to vector<1x1x8x10xf32>
    tpu.vector_store %arg5[%c8, %c0_40, %c0_41, %c0_42], %58 {strides = array<i32>} : memref<9x5x8x10xf32, #tpu.memory_space<vmem>>, vector<1x1x8x10xf32>,
    %c0_43 = arith.constant 0 : index
    %c1_44 = arith.constant 1 : index
    %c0_45 = arith.constant 0 : index
    %c0_46 = arith.constant 0 : index
    %59 = vector.load %arg2[%c0_43, %c1_44, %c0_45, %c0_46] : memref<8x5x9x10xf32, #tpu.memory_space<vmem>>, vector<8x1x9x10xf32>
    %60 = vector.shape_cast %59 : vector<8x1x9x10xf32> to vector<8x9x10xf32>
    %cst_47 = arith.constant 0.000000e+00 : f32
    %61 = vector.broadcast %cst_47 : f32 to vector<8x9x10xf32>
    %62 = arith.maximumf %60, %61 : vector<8x9x10xf32>
    %63 = vector.extract_strided_slice %62 {offsets = [0, 0, 0], sizes = [8, 1, 10], strides = [1, 1, 1]} : vector<8x9x10xf32> to vector<8x1x10xf32>
    %64 = vector.shape_cast %63 : vector<8x1x10xf32> to vector<8x10xf32>
    %c0_48 = arith.constant 0 : index
    %c1_49 = arith.constant 1 : index
    %c0_50 = arith.constant 0 : index
    %c0_51 = arith.constant 0 : index
    %65 = vector.load %arg5[%c0_48, %c1_49, %c0_50, %c0_51] : memref<9x5x8x10xf32, #tpu.memory_space<vmem>>, vector<1x1x8x10xf32>
    %66 = vector.shape_cast %65 : vector<1x1x8x10xf32> to vector<8x10xf32>
    %67 = vector.shape_cast %64 : vector<8x10xf32> to vector<1x1x8x10xf32>
    tpu.vector_store %arg5[%c0_48, %c1_49, %c0_50, %c0_51], %67 {strides = array<i32>} : memref<9x5x8x10xf32, #tpu.memory_space<vmem>>, vector<1x1x8x10xf32>,
    %68 = vector.extract_strided_slice %62 {offsets = [0, 1, 0], sizes = [8, 1, 10], strides = [1, 1, 1]} : vector<8x9x10xf32> to vector<8x1x10xf32>
    %69 = vector.shape_cast %68 : vector<8x1x10xf32> to vector<8x10xf32>
    %c1_52 = arith.constant 1 : index
    %c1_53 = arith.constant 1 : index
    %c0_54 = arith.constant 0 : index
    %c0_55 = arith.constant 0 : index
    %70 = vector.load %arg5[%c1_52, %c1_53, %c0_54, %c0_55] : memref<9x5x8x10xf32, #tpu.memory_space<vmem>>, vector<1x1x8x10xf32>
    %71 = vector.shape_cast %70 : vector<1x1x8x10xf32> to vector<8x10xf32>
    %72 = vector.shape_cast %69 : vector<8x10xf32> to vector<1x1x8x10xf32>
    tpu.vector_store %arg5[%c1_52, %c1_53, %c0_54, %c0_55], %72 {strides = array<i32>} : memref<9x5x8x10xf32, #tpu.memory_space<vmem>>, vector<1x1x8x10xf32>,
    %73 = vector.extract_strided_slice %62 {offsets = [0, 2, 0], sizes = [8, 1, 10], strides = [1, 1, 1]} : vector<8x9x10xf32> to vector<8x1x10xf32>
    %74 = vector.shape_cast %73 : vector<8x1x10xf32> to vector<8x10xf32>
    %c2_56 = arith.constant 2 : index
    %c1_57 = arith.constant 1 : index
    %c0_58 = arith.constant 0 : index
    %c0_59 = arith.constant 0 : index
    %75 = vector.load %arg5[%c2_56, %c1_57, %c0_58, %c0_59] : memref<9x5x8x10xf32, #tpu.memory_space<vmem>>, vector<1x1x8x10xf32>
    %76 = vector.shape_cast %75 : vector<1x1x8x10xf32> to vector<8x10xf32>
    %77 = vector.shape_cast %74 : vector<8x10xf32> to vector<1x1x8x10xf32>
    tpu.vector_store %arg5[%c2_56, %c1_57, %c0_58, %c0_59], %77 {strides = array<i32>} : memref<9x5x8x10xf32, #tpu.memory_space<vmem>>, vector<1x1x8x10xf32>,
    %78 = vector.extract_strided_slice %62 {offsets = [0, 3, 0], sizes = [8, 1, 10], strides = [1, 1, 1]} : vector<8x9x10xf32> to vector<8x1x10xf32>
    %79 = vector.shape_cast %78 : vector<8x1x10xf32> to vector<8x10xf32>
    %c3_60 = arith.constant 3 : index
    %c1_61 = arith.constant 1 : index
    %c0_62 = arith.constant 0 : index
    %c0_63 = arith.constant 0 : index
    %80 = vector.load %arg5[%c3_60, %c1_61, %c0_62, %c0_63] : memref<9x5x8x10xf32, #tpu.memory_space<vmem>>, vector<1x1x8x10xf32>
    %81 = vector.shape_cast %80 : vector<1x1x8x10xf32> to vector<8x10xf32>
    %82 = vector.shape_cast %79 : vector<8x10xf32> to vector<1x1x8x10xf32>
    tpu.vector_store %arg5[%c3_60, %c1_61, %c0_62, %c0_63], %82 {strides = array<i32>} : memref<9x5x8x10xf32, #tpu.memory_space<vmem>>, vector<1x1x8x10xf32>,
    %83 = vector.extract_strided_slice %62 {offsets = [0, 4, 0], sizes = [8, 1, 10], strides = [1, 1, 1]} : vector<8x9x10xf32> to vector<8x1x10xf32>
    %84 = vector.shape_cast %83 : vector<8x1x10xf32> to vector<8x10xf32>
    %c4_64 = arith.constant 4 : index
    %c1_65 = arith.constant 1 : index
    %c0_66 = arith.constant 0 : index
    %c0_67 = arith.constant 0 : index
    %85 = vector.load %arg5[%c4_64, %c1_65, %c0_66, %c0_67] : memref<9x5x8x10xf32, #tpu.memory_space<vmem>>, vector<1x1x8x10xf32>
    %86 = vector.shape_cast %85 : vector<1x1x8x10xf32> to vector<8x10xf32>
    %87 = vector.shape_cast %84 : vector<8x10xf32> to vector<1x1x8x10xf32>
    tpu.vector_store %arg5[%c4_64, %c1_65, %c0_66, %c0_67], %87 {strides = array<i32>} : memref<9x5x8x10xf32, #tpu.memory_space<vmem>>, vector<1x1x8x10xf32>,
    %88 = vector.extract_strided_slice %62 {offsets = [0, 5, 0], sizes = [8, 1, 10], strides = [1, 1, 1]} : vector<8x9x10xf32> to vector<8x1x10xf32>
    %89 = vector.shape_cast %88 : vector<8x1x10xf32> to vector<8x10xf32>
    %c5_68 = arith.constant 5 : index
    %c1_69 = arith.constant 1 : index
    %c0_70 = arith.constant 0 : index
    %c0_71 = arith.constant 0 : index
    %90 = vector.load %arg5[%c5_68, %c1_69, %c0_70, %c0_71] : memref<9x5x8x10xf32, #tpu.memory_space<vmem>>, vector<1x1x8x10xf32>
    %91 = vector.shape_cast %90 : vector<1x1x8x10xf32> to vector<8x10xf32>
    %92 = vector.shape_cast %89 : vector<8x10xf32> to vector<1x1x8x10xf32>
    tpu.vector_store %arg5[%c5_68, %c1_69, %c0_70, %c0_71], %92 {strides = array<i32>} : memref<9x5x8x10xf32, #tpu.memory_space<vmem>>, vector<1x1x8x10xf32>,
    %93 = vector.extract_strided_slice %62 {offsets = [0, 6, 0], sizes = [8, 1, 10], strides = [1, 1, 1]} : vector<8x9x10xf32> to vector<8x1x10xf32>
    %94 = vector.shape_cast %93 : vector<8x1x10xf32> to vector<8x10xf32>
    %c6_72 = arith.constant 6 : index
    %c1_73 = arith.constant 1 : index
    %c0_74 = arith.constant 0 : index
    %c0_75 = arith.constant 0 : index
    %95 = vector.load %arg5[%c6_72, %c1_73, %c0_74, %c0_75] : memref<9x5x8x10xf32, #tpu.memory_space<vmem>>, vector<1x1x8x10xf32>
    %96 = vector.shape_cast %95 : vector<1x1x8x10xf32> to vector<8x10xf32>
    %97 = vector.shape_cast %94 : vector<8x10xf32> to vector<1x1x8x10xf32>
    tpu.vector_store %arg5[%c6_72, %c1_73, %c0_74, %c0_75], %97 {strides = array<i32>} : memref<9x5x8x10xf32, #tpu.memory_space<vmem>>, vector<1x1x8x10xf32>,
    %98 = vector.extract_strided_slice %62 {offsets = [0, 7, 0], sizes = [8, 1, 10], strides = [1, 1, 1]} : vector<8x9x10xf32> to vector<8x1x10xf32>
    %99 = vector.shape_cast %98 : vector<8x1x10xf32> to vector<8x10xf32>
    %c7_76 = arith.constant 7 : index
    %c1_77 = arith.constant 1 : index
    %c0_78 = arith.constant 0 : index
    %c0_79 = arith.constant 0 : index
    %100 = vector.load %arg5[%c7_76, %c1_77, %c0_78, %c0_79] : memref<9x5x8x10xf32, #tpu.memory_space<vmem>>, vector<1x1x8x10xf32>
    %101 = vector.shape_cast %100 : vector<1x1x8x10xf32> to vector<8x10xf32>
    %102 = vector.shape_cast %99 : vector<8x10xf32> to vector<1x1x8x10xf32>
    tpu.vector_store %arg5[%c7_76, %c1_77, %c0_78, %c0_79], %102 {strides = array<i32>} : memref<9x5x8x10xf32, #tpu.memory_space<vmem>>, vector<1x1x8x10xf32>,
    %103 = vector.extract_strided_slice %62 {offsets = [0, 8, 0], sizes = [8, 1, 10], strides = [1, 1, 1]} : vector<8x9x10xf32> to vector<8x1x10xf32>
    %104 = vector.shape_cast %103 : vector<8x1x10xf32> to vector<8x10xf32>
    %c8_80 = arith.constant 8 : index
    %c1_81 = arith.constant 1 : index
    %c0_82 = arith.constant 0 : index
    %c0_83 = arith.constant 0 : index
    %105 = vector.load %arg5[%c8_80, %c1_81, %c0_82, %c0_83] : memref<9x5x8x10xf32, #tpu.memory_space<vmem>>, vector<1x1x8x10xf32>
    %106 = vector.shape_cast %105 : vector<1x1x8x10xf32> to vector<8x10xf32>
    %107 = vector.shape_cast %104 : vector<8x10xf32> to vector<1x1x8x10xf32>
    tpu.vector_store %arg5[%c8_80, %c1_81, %c0_82, %c0_83], %107 {strides = array<i32>} : memref<9x5x8x10xf32, #tpu.memory_space<vmem>>, vector<1x1x8x10xf32>,
    %c0_84 = arith.constant 0 : index
    %c2_85 = arith.constant 2 : index
    %c0_86 = arith.constant 0 : index
    %c0_87 = arith.constant 0 : index
    %108 = vector.load %arg2[%c0_84, %c2_85, %c0_86, %c0_87] : memref<8x5x9x10xf32, #tpu.memory_space<vmem>>, vector<8x1x9x10xf32>
    %109 = vector.shape_cast %108 : vector<8x1x9x10xf32> to vector<8x9x10xf32>
    %cst_88 = arith.constant 0.000000e+00 : f32
    %110 = vector.broadcast %cst_88 : f32 to vector<8x9x10xf32>
    %111 = arith.maximumf %109, %110 : vector<8x9x10xf32>
    %112 = vector.extract_strided_slice %111 {offsets = [0, 0, 0], sizes = [8, 1, 10], strides = [1, 1, 1]} : vector<8x9x10xf32> to vector<8x1x10xf32>
    %113 = vector.shape_cast %112 : vector<8x1x10xf32> to vector<8x10xf32>
    %c0_89 = arith.constant 0 : index
    %c2_90 = arith.constant 2 : index
    %c0_91 = arith.constant 0 : index
    %c0_92 = arith.constant 0 : index
    %114 = vector.load %arg5[%c0_89, %c2_90, %c0_91, %c0_92] : memref<9x5x8x10xf32, #tpu.memory_space<vmem>>, vector<1x1x8x10xf32>
    %115 = vector.shape_cast %114 : vector<1x1x8x10xf32> to vector<8x10xf32>
    %116 = vector.shape_cast %113 : vector<8x10xf32> to vector<1x1x8x10xf32>
    tpu.vector_store %arg5[%c0_89, %c2_90, %c0_91, %c0_92], %116 {strides = array<i32>} : memref<9x5x8x10xf32, #tpu.memory_space<vmem>>, vector<1x1x8x10xf32>,
    %117 = vector.extract_strided_slice %111 {offsets = [0, 1, 0], sizes = [8, 1, 10], strides = [1, 1, 1]} : vector<8x9x10xf32> to vector<8x1x10xf32>
    %118 = vector.shape_cast %117 : vector<8x1x10xf32> to vector<8x10xf32>
    %c1_93 = arith.constant 1 : index
    %c2_94 = arith.constant 2 : index
    %c0_95 = arith.constant 0 : index
    %c0_96 = arith.constant 0 : index
    %119 = vector.load %arg5[%c1_93, %c2_94, %c0_95, %c0_96] : memref<9x5x8x10xf32, #tpu.memory_space<vmem>>, vector<1x1x8x10xf32>
    %120 = vector.shape_cast %119 : vector<1x1x8x10xf32> to vector<8x10xf32>
    %121 = vector.shape_cast %118 : vector<8x10xf32> to vector<1x1x8x10xf32>
    tpu.vector_store %arg5[%c1_93, %c2_94, %c0_95, %c0_96], %121 {strides = array<i32>} : memref<9x5x8x10xf32, #tpu.memory_space<vmem>>, vector<1x1x8x10xf32>,
    %122 = vector.extract_strided_slice %111 {offsets = [0, 2, 0], sizes = [8, 1, 10], strides = [1, 1, 1]} : vector<8x9x10xf32> to vector<8x1x10xf32>
    %123 = vector.shape_cast %122 : vector<8x1x10xf32> to vector<8x10xf32>
    %c2_97 = arith.constant 2 : index
    %c2_98 = arith.constant 2 : index
    %c0_99 = arith.constant 0 : index
    %c0_100 = arith.constant 0 : index
    %124 = vector.load %arg5[%c2_97, %c2_98, %c0_99, %c0_100] : memref<9x5x8x10xf32, #tpu.memory_space<vmem>>, vector<1x1x8x10xf32>
    %125 = vector.shape_cast %124 : vector<1x1x8x10xf32> to vector<8x10xf32>
    %126 = vector.shape_cast %123 : vector<8x10xf32> to vector<1x1x8x10xf32>
    tpu.vector_store %arg5[%c2_97, %c2_98, %c0_99, %c0_100], %126 {strides = array<i32>} : memref<9x5x8x10xf32, #tpu.memory_space<vmem>>, vector<1x1x8x10xf32>,
    %127 = vector.extract_strided_slice %111 {offsets = [0, 3, 0], sizes = [8, 1, 10], strides = [1, 1, 1]} : vector<8x9x10xf32> to vector<8x1x10xf32>
    %128 = vector.shape_cast %127 : vector<8x1x10xf32> to vector<8x10xf32>
    %c3_101 = arith.constant 3 : index
    %c2_102 = arith.constant 2 : index
    %c0_103 = arith.constant 0 : index
    %c0_104 = arith.constant 0 : index
    %129 = vector.load %arg5[%c3_101, %c2_102, %c0_103, %c0_104] : memref<9x5x8x10xf32, #tpu.memory_space<vmem>>, vector<1x1x8x10xf32>
    %130 = vector.shape_cast %129 : vector<1x1x8x10xf32> to vector<8x10xf32>
    %131 = vector.shape_cast %128 : vector<8x10xf32> to vector<1x1x8x10xf32>
    tpu.vector_store %arg5[%c3_101, %c2_102, %c0_103, %c0_104], %131 {strides = array<i32>} : memref<9x5x8x10xf32, #tpu.memory_space<vmem>>, vector<1x1x8x10xf32>,
    %132 = vector.extract_strided_slice %111 {offsets = [0, 4, 0], sizes = [8, 1, 10], strides = [1, 1, 1]} : vector<8x9x10xf32> to vector<8x1x10xf32>
    %133 = vector.shape_cast %132 : vector<8x1x10xf32> to vector<8x10xf32>
    %c4_105 = arith.constant 4 : index
    %c2_106 = arith.constant 2 : index
    %c0_107 = arith.constant 0 : index
    %c0_108 = arith.constant 0 : index
    %134 = vector.load %arg5[%c4_105, %c2_106, %c0_107, %c0_108] : memref<9x5x8x10xf32, #tpu.memory_space<vmem>>, vector<1x1x8x10xf32>
    %135 = vector.shape_cast %134 : vector<1x1x8x10xf32> to vector<8x10xf32>
    %136 = vector.shape_cast %133 : vector<8x10xf32> to vector<1x1x8x10xf32>
    tpu.vector_store %arg5[%c4_105, %c2_106, %c0_107, %c0_108], %136 {strides = array<i32>} : memref<9x5x8x10xf32, #tpu.memory_space<vmem>>, vector<1x1x8x10xf32>,
    %137 = vector.extract_strided_slice %111 {offsets = [0, 5, 0], sizes = [8, 1, 10], strides = [1, 1, 1]} : vector<8x9x10xf32> to vector<8x1x10xf32>
    %138 = vector.shape_cast %137 : vector<8x1x10xf32> to vector<8x10xf32>
    %c5_109 = arith.constant 5 : index
    %c2_110 = arith.constant 2 : index
    %c0_111 = arith.constant 0 : index
    %c0_112 = arith.constant 0 : index
    %139 = vector.load %arg5[%c5_109, %c2_110, %c0_111, %c0_112] : memref<9x5x8x10xf32, #tpu.memory_space<vmem>>, vector<1x1x8x10xf32>
    %140 = vector.shape_cast %139 : vector<1x1x8x10xf32> to vector<8x10xf32>
    %141 = vector.shape_cast %138 : vector<8x10xf32> to vector<1x1x8x10xf32>
    tpu.vector_store %arg5[%c5_109, %c2_110, %c0_111, %c0_112], %141 {strides = array<i32>} : memref<9x5x8x10xf32, #tpu.memory_space<vmem>>, vector<1x1x8x10xf32>,
    %142 = vector.extract_strided_slice %111 {offsets = [0, 6, 0], sizes = [8, 1, 10], strides = [1, 1, 1]} : vector<8x9x10xf32> to vector<8x1x10xf32>
    %143 = vector.shape_cast %142 : vector<8x1x10xf32> to vector<8x10xf32>
    %c6_113 = arith.constant 6 : index
    %c2_114 = arith.constant 2 : index
    %c0_115 = arith.constant 0 : index
    %c0_116 = arith.constant 0 : index
    %144 = vector.load %arg5[%c6_113, %c2_114, %c0_115, %c0_116] : memref<9x5x8x10xf32, #tpu.memory_space<vmem>>, vector<1x1x8x10xf32>
    %145 = vector.shape_cast %144 : vector<1x1x8x10xf32> to vector<8x10xf32>
    %146 = vector.shape_cast %143 : vector<8x10xf32> to vector<1x1x8x10xf32>
    tpu.vector_store %arg5[%c6_113, %c2_114, %c0_115, %c0_116], %146 {strides = array<i32>} : memref<9x5x8x10xf32, #tpu.memory_space<vmem>>, vector<1x1x8x10xf32>,
    %147 = vector.extract_strided_slice %111 {offsets = [0, 7, 0], sizes = [8, 1, 10], strides = [1, 1, 1]} : vector<8x9x10xf32> to vector<8x1x10xf32>
    %148 = vector.shape_cast %147 : vector<8x1x10xf32> to vector<8x10xf32>
    %c7_117 = arith.constant 7 : index
    %c2_118 = arith.constant 2 : index
    %c0_119 = arith.constant 0 : index
    %c0_120 = arith.constant 0 : index
    %149 = vector.load %arg5[%c7_117, %c2_118, %c0_119, %c0_120] : memref<9x5x8x10xf32, #tpu.memory_space<vmem>>, vector<1x1x8x10xf32>
    %150 = vector.shape_cast %149 : vector<1x1x8x10xf32> to vector<8x10xf32>
    %151 = vector.shape_cast %148 : vector<8x10xf32> to vector<1x1x8x10xf32>
    tpu.vector_store %arg5[%c7_117, %c2_118, %c0_119, %c0_120], %151 {strides = array<i32>} : memref<9x5x8x10xf32, #tpu.memory_space<vmem>>, vector<1x1x8x10xf32>,
    %152 = vector.extract_strided_slice %111 {offsets = [0, 8, 0], sizes = [8, 1, 10], strides = [1, 1, 1]} : vector<8x9x10xf32> to vector<8x1x10xf32>
    %153 = vector.shape_cast %152 : vector<8x1x10xf32> to vector<8x10xf32>
    %c8_121 = arith.constant 8 : index
    %c2_122 = arith.constant 2 : index
    %c0_123 = arith.constant 0 : index
    %c0_124 = arith.constant 0 : index
    %154 = vector.load %arg5[%c8_121, %c2_122, %c0_123, %c0_124] : memref<9x5x8x10xf32, #tpu.memory_space<vmem>>, vector<1x1x8x10xf32>
    %155 = vector.shape_cast %154 : vector<1x1x8x10xf32> to vector<8x10xf32>
    %156 = vector.shape_cast %153 : vector<8x10xf32> to vector<1x1x8x10xf32>
    tpu.vector_store %arg5[%c8_121, %c2_122, %c0_123, %c0_124], %156 {strides = array<i32>} : memref<9x5x8x10xf32, #tpu.memory_space<vmem>>, vector<1x1x8x10xf32>,
    %c0_125 = arith.constant 0 : index
    %c3_126 = arith.constant 3 : index
    %c0_127 = arith.constant 0 : index
    %c0_128 = arith.constant 0 : index
    %157 = vector.load %arg2[%c0_125, %c3_126, %c0_127, %c0_128] : memref<8x5x9x10xf32, #tpu.memory_space<vmem>>, vector<8x1x9x10xf32>
    %158 = vector.shape_cast %157 : vector<8x1x9x10xf32> to vector<8x9x10xf32>
    %cst_129 = arith.constant 0.000000e+00 : f32
    %159 = vector.broadcast %cst_129 : f32 to vector<8x9x10xf32>
    %160 = arith.maximumf %158, %159 : vector<8x9x10xf32>
    %161 = vector.extract_strided_slice %160 {offsets = [0, 0, 0], sizes = [8, 1, 10], strides = [1, 1, 1]} : vector<8x9x10xf32> to vector<8x1x10xf32>
    %162 = vector.shape_cast %161 : vector<8x1x10xf32> to vector<8x10xf32>
    %c0_130 = arith.constant 0 : index
    %c3_131 = arith.constant 3 : index
    %c0_132 = arith.constant 0 : index
    %c0_133 = arith.constant 0 : index
    %163 = vector.load %arg5[%c0_130, %c3_131, %c0_132, %c0_133] : memref<9x5x8x10xf32, #tpu.memory_space<vmem>>, vector<1x1x8x10xf32>
    %164 = vector.shape_cast %163 : vector<1x1x8x10xf32> to vector<8x10xf32>
    %165 = vector.shape_cast %162 : vector<8x10xf32> to vector<1x1x8x10xf32>
    tpu.vector_store %arg5[%c0_130, %c3_131, %c0_132, %c0_133], %165 {strides = array<i32>} : memref<9x5x8x10xf32, #tpu.memory_space<vmem>>, vector<1x1x8x10xf32>,
    %166 = vector.extract_strided_slice %160 {offsets = [0, 1, 0], sizes = [8, 1, 10], strides = [1, 1, 1]} : vector<8x9x10xf32> to vector<8x1x10xf32>
    %167 = vector.shape_cast %166 : vector<8x1x10xf32> to vector<8x10xf32>
    %c1_134 = arith.constant 1 : index
    %c3_135 = arith.constant 3 : index
    %c0_136 = arith.constant 0 : index
    %c0_137 = arith.constant 0 : index
    %168 = vector.load %arg5[%c1_134, %c3_135, %c0_136, %c0_137] : memref<9x5x8x10xf32, #tpu.memory_space<vmem>>, vector<1x1x8x10xf32>
    %169 = vector.shape_cast %168 : vector<1x1x8x10xf32> to vector<8x10xf32>
    %170 = vector.shape_cast %167 : vector<8x10xf32> to vector<1x1x8x10xf32>
    tpu.vector_store %arg5[%c1_134, %c3_135, %c0_136, %c0_137], %170 {strides = array<i32>} : memref<9x5x8x10xf32, #tpu.memory_space<vmem>>, vector<1x1x8x10xf32>,
    %171 = vector.extract_strided_slice %160 {offsets = [0, 2, 0], sizes = [8, 1, 10], strides = [1, 1, 1]} : vector<8x9x10xf32> to vector<8x1x10xf32>
    %172 = vector.shape_cast %171 : vector<8x1x10xf32> to vector<8x10xf32>
    %c2_138 = arith.constant 2 : index
    %c3_139 = arith.constant 3 : index
    %c0_140 = arith.constant 0 : index
    %c0_141 = arith.constant 0 : index
    %173 = vector.load %arg5[%c2_138, %c3_139, %c0_140, %c0_141] : memref<9x5x8x10xf32, #tpu.memory_space<vmem>>, vector<1x1x8x10xf32>
    %174 = vector.shape_cast %173 : vector<1x1x8x10xf32> to vector<8x10xf32>
    %175 = vector.shape_cast %172 : vector<8x10xf32> to vector<1x1x8x10xf32>
    tpu.vector_store %arg5[%c2_138, %c3_139, %c0_140, %c0_141], %175 {strides = array<i32>} : memref<9x5x8x10xf32, #tpu.memory_space<vmem>>, vector<1x1x8x10xf32>,
    %176 = vector.extract_strided_slice %160 {offsets = [0, 3, 0], sizes = [8, 1, 10], strides = [1, 1, 1]} : vector<8x9x10xf32> to vector<8x1x10xf32>
    %177 = vector.shape_cast %176 : vector<8x1x10xf32> to vector<8x10xf32>
    %c3_142 = arith.constant 3 : index
    %c3_143 = arith.constant 3 : index
    %c0_144 = arith.constant 0 : index
    %c0_145 = arith.constant 0 : index
    %178 = vector.load %arg5[%c3_142, %c3_143, %c0_144, %c0_145] : memref<9x5x8x10xf32, #tpu.memory_space<vmem>>, vector<1x1x8x10xf32>
    %179 = vector.shape_cast %178 : vector<1x1x8x10xf32> to vector<8x10xf32>
    %180 = vector.shape_cast %177 : vector<8x10xf32> to vector<1x1x8x10xf32>
    tpu.vector_store %arg5[%c3_142, %c3_143, %c0_144, %c0_145], %180 {strides = array<i32>} : memref<9x5x8x10xf32, #tpu.memory_space<vmem>>, vector<1x1x8x10xf32>,
    %181 = vector.extract_strided_slice %160 {offsets = [0, 4, 0], sizes = [8, 1, 10], strides = [1, 1, 1]} : vector<8x9x10xf32> to vector<8x1x10xf32>
    %182 = vector.shape_cast %181 : vector<8x1x10xf32> to vector<8x10xf32>
    %c4_146 = arith.constant 4 : index
    %c3_147 = arith.constant 3 : index
    %c0_148 = arith.constant 0 : index
    %c0_149 = arith.constant 0 : index
    %183 = vector.load %arg5[%c4_146, %c3_147, %c0_148, %c0_149] : memref<9x5x8x10xf32, #tpu.memory_space<vmem>>, vector<1x1x8x10xf32>
    %184 = vector.shape_cast %183 : vector<1x1x8x10xf32> to vector<8x10xf32>
    %185 = vector.shape_cast %182 : vector<8x10xf32> to vector<1x1x8x10xf32>
    tpu.vector_store %arg5[%c4_146, %c3_147, %c0_148, %c0_149], %185 {strides = array<i32>} : memref<9x5x8x10xf32, #tpu.memory_space<vmem>>, vector<1x1x8x10xf32>,
    %186 = vector.extract_strided_slice %160 {offsets = [0, 5, 0], sizes = [8, 1, 10], strides = [1, 1, 1]} : vector<8x9x10xf32> to vector<8x1x10xf32>
    %187 = vector.shape_cast %186 : vector<8x1x10xf32> to vector<8x10xf32>
    %c5_150 = arith.constant 5 : index
    %c3_151 = arith.constant 3 : index
    %c0_152 = arith.constant 0 : index
    %c0_153 = arith.constant 0 : index
    %188 = vector.load %arg5[%c5_150, %c3_151, %c0_152, %c0_153] : memref<9x5x8x10xf32, #tpu.memory_space<vmem>>, vector<1x1x8x10xf32>
    %189 = vector.shape_cast %188 : vector<1x1x8x10xf32> to vector<8x10xf32>
    %190 = vector.shape_cast %187 : vector<8x10xf32> to vector<1x1x8x10xf32>
    tpu.vector_store %arg5[%c5_150, %c3_151, %c0_152, %c0_153], %190 {strides = array<i32>} : memref<9x5x8x10xf32, #tpu.memory_space<vmem>>, vector<1x1x8x10xf32>,
    %191 = vector.extract_strided_slice %160 {offsets = [0, 6, 0], sizes = [8, 1, 10], strides = [1, 1, 1]} : vector<8x9x10xf32> to vector<8x1x10xf32>
    %192 = vector.shape_cast %191 : vector<8x1x10xf32> to vector<8x10xf32>
    %c6_154 = arith.constant 6 : index
    %c3_155 = arith.constant 3 : index
    %c0_156 = arith.constant 0 : index
    %c0_157 = arith.constant 0 : index
    %193 = vector.load %arg5[%c6_154, %c3_155, %c0_156, %c0_157] : memref<9x5x8x10xf32, #tpu.memory_space<vmem>>, vector<1x1x8x10xf32>
    %194 = vector.shape_cast %193 : vector<1x1x8x10xf32> to vector<8x10xf32>
    %195 = vector.shape_cast %192 : vector<8x10xf32> to vector<1x1x8x10xf32>
    tpu.vector_store %arg5[%c6_154, %c3_155, %c0_156, %c0_157], %195 {strides = array<i32>} : memref<9x5x8x10xf32, #tpu.memory_space<vmem>>, vector<1x1x8x10xf32>,
    %196 = vector.extract_strided_slice %160 {offsets = [0, 7, 0], sizes = [8, 1, 10], strides = [1, 1, 1]} : vector<8x9x10xf32> to vector<8x1x10xf32>
    %197 = vector.shape_cast %196 : vector<8x1x10xf32> to vector<8x10xf32>
    %c7_158 = arith.constant 7 : index
    %c3_159 = arith.constant 3 : index
    %c0_160 = arith.constant 0 : index
    %c0_161 = arith.constant 0 : index
    %198 = vector.load %arg5[%c7_158, %c3_159, %c0_160, %c0_161] : memref<9x5x8x10xf32, #tpu.memory_space<vmem>>, vector<1x1x8x10xf32>
    %199 = vector.shape_cast %198 : vector<1x1x8x10xf32> to vector<8x10xf32>
    %200 = vector.shape_cast %197 : vector<8x10xf32> to vector<1x1x8x10xf32>
    tpu.vector_store %arg5[%c7_158, %c3_159, %c0_160, %c0_161], %200 {strides = array<i32>} : memref<9x5x8x10xf32, #tpu.memory_space<vmem>>, vector<1x1x8x10xf32>,
    %201 = vector.extract_strided_slice %160 {offsets = [0, 8, 0], sizes = [8, 1, 10], strides = [1, 1, 1]} : vector<8x9x10xf32> to vector<8x1x10xf32>
    %202 = vector.shape_cast %201 : vector<8x1x10xf32> to vector<8x10xf32>
    %c8_162 = arith.constant 8 : index
    %c3_163 = arith.constant 3 : index
    %c0_164 = arith.constant 0 : index
    %c0_165 = arith.constant 0 : index
    %203 = vector.load %arg5[%c8_162, %c3_163, %c0_164, %c0_165] : memref<9x5x8x10xf32, #tpu.memory_space<vmem>>, vector<1x1x8x10xf32>
    %204 = vector.shape_cast %203 : vector<1x1x8x10xf32> to vector<8x10xf32>
    %205 = vector.shape_cast %202 : vector<8x10xf32> to vector<1x1x8x10xf32>
    tpu.vector_store %arg5[%c8_162, %c3_163, %c0_164, %c0_165], %205 {strides = array<i32>} : memref<9x5x8x10xf32, #tpu.memory_space<vmem>>, vector<1x1x8x10xf32>,
    %c0_166 = arith.constant 0 : index
    %c4_167 = arith.constant 4 : index
    %c0_168 = arith.constant 0 : index
    %c0_169 = arith.constant 0 : index
    %206 = vector.load %arg2[%c0_166, %c4_167, %c0_168, %c0_169] : memref<8x5x9x10xf32, #tpu.memory_space<vmem>>, vector<8x1x9x10xf32>
    %207 = vector.shape_cast %206 : vector<8x1x9x10xf32> to vector<8x9x10xf32>
    %cst_170 = arith.constant 0.000000e+00 : f32
    %208 = vector.broadcast %cst_170 : f32 to vector<8x9x10xf32>
    %209 = arith.maximumf %207, %208 : vector<8x9x10xf32>
    %210 = vector.extract_strided_slice %209 {offsets = [0, 0, 0], sizes = [8, 1, 10], strides = [1, 1, 1]} : vector<8x9x10xf32> to vector<8x1x10xf32>
    %211 = vector.shape_cast %210 : vector<8x1x10xf32> to vector<8x10xf32>
    %c0_171 = arith.constant 0 : index
    %c4_172 = arith.constant 4 : index
    %c0_173 = arith.constant 0 : index
    %c0_174 = arith.constant 0 : index
    %212 = vector.load %arg5[%c0_171, %c4_172, %c0_173, %c0_174] : memref<9x5x8x10xf32, #tpu.memory_space<vmem>>, vector<1x1x8x10xf32>
    %213 = vector.shape_cast %212 : vector<1x1x8x10xf32> to vector<8x10xf32>
    %214 = vector.shape_cast %211 : vector<8x10xf32> to vector<1x1x8x10xf32>
    tpu.vector_store %arg5[%c0_171, %c4_172, %c0_173, %c0_174], %214 {strides = array<i32>} : memref<9x5x8x10xf32, #tpu.memory_space<vmem>>, vector<1x1x8x10xf32>,
    %215 = vector.extract_strided_slice %209 {offsets = [0, 1, 0], sizes = [8, 1, 10], strides = [1, 1, 1]} : vector<8x9x10xf32> to vector<8x1x10xf32>
    %216 = vector.shape_cast %215 : vector<8x1x10xf32> to vector<8x10xf32>
    %c1_175 = arith.constant 1 : index
    %c4_176 = arith.constant 4 : index
    %c0_177 = arith.constant 0 : index
    %c0_178 = arith.constant 0 : index
    %217 = vector.load %arg5[%c1_175, %c4_176, %c0_177, %c0_178] : memref<9x5x8x10xf32, #tpu.memory_space<vmem>>, vector<1x1x8x10xf32>
    %218 = vector.shape_cast %217 : vector<1x1x8x10xf32> to vector<8x10xf32>
    %219 = vector.shape_cast %216 : vector<8x10xf32> to vector<1x1x8x10xf32>
    tpu.vector_store %arg5[%c1_175, %c4_176, %c0_177, %c0_178], %219 {strides = array<i32>} : memref<9x5x8x10xf32, #tpu.memory_space<vmem>>, vector<1x1x8x10xf32>,
    %220 = vector.extract_strided_slice %209 {offsets = [0, 2, 0], sizes = [8, 1, 10], strides = [1, 1, 1]} : vector<8x9x10xf32> to vector<8x1x10xf32>
    %221 = vector.shape_cast %220 : vector<8x1x10xf32> to vector<8x10xf32>
    %c2_179 = arith.constant 2 : index
    %c4_180 = arith.constant 4 : index
    %c0_181 = arith.constant 0 : index
    %c0_182 = arith.constant 0 : index
    %222 = vector.load %arg5[%c2_179, %c4_180, %c0_181, %c0_182] : memref<9x5x8x10xf32, #tpu.memory_space<vmem>>, vector<1x1x8x10xf32>
    %223 = vector.shape_cast %222 : vector<1x1x8x10xf32> to vector<8x10xf32>
    %224 = vector.shape_cast %221 : vector<8x10xf32> to vector<1x1x8x10xf32>
    tpu.vector_store %arg5[%c2_179, %c4_180, %c0_181, %c0_182], %224 {strides = array<i32>} : memref<9x5x8x10xf32, #tpu.memory_space<vmem>>, vector<1x1x8x10xf32>,
    %225 = vector.extract_strided_slice %209 {offsets = [0, 3, 0], sizes = [8, 1, 10], strides = [1, 1, 1]} : vector<8x9x10xf32> to vector<8x1x10xf32>
    %226 = vector.shape_cast %225 : vector<8x1x10xf32> to vector<8x10xf32>
    %c3_183 = arith.constant 3 : index
    %c4_184 = arith.constant 4 : index
    %c0_185 = arith.constant 0 : index
    %c0_186 = arith.constant 0 : index
    %227 = vector.load %arg5[%c3_183, %c4_184, %c0_185, %c0_186] : memref<9x5x8x10xf32, #tpu.memory_space<vmem>>, vector<1x1x8x10xf32>
    %228 = vector.shape_cast %227 : vector<1x1x8x10xf32> to vector<8x10xf32>
    %229 = vector.shape_cast %226 : vector<8x10xf32> to vector<1x1x8x10xf32>
    tpu.vector_store %arg5[%c3_183, %c4_184, %c0_185, %c0_186], %229 {strides = array<i32>} : memref<9x5x8x10xf32, #tpu.memory_space<vmem>>, vector<1x1x8x10xf32>,
    %230 = vector.extract_strided_slice %209 {offsets = [0, 4, 0], sizes = [8, 1, 10], strides = [1, 1, 1]} : vector<8x9x10xf32> to vector<8x1x10xf32>
    %231 = vector.shape_cast %230 : vector<8x1x10xf32> to vector<8x10xf32>
    %c4_187 = arith.constant 4 : index
    %c4_188 = arith.constant 4 : index
    %c0_189 = arith.constant 0 : index
    %c0_190 = arith.constant 0 : index
    %232 = vector.load %arg5[%c4_187, %c4_188, %c0_189, %c0_190] : memref<9x5x8x10xf32, #tpu.memory_space<vmem>>, vector<1x1x8x10xf32>
    %233 = vector.shape_cast %232 : vector<1x1x8x10xf32> to vector<8x10xf32>
    %234 = vector.shape_cast %231 : vector<8x10xf32> to vector<1x1x8x10xf32>
    tpu.vector_store %arg5[%c4_187, %c4_188, %c0_189, %c0_190], %234 {strides = array<i32>} : memref<9x5x8x10xf32, #tpu.memory_space<vmem>>, vector<1x1x8x10xf32>,
    %235 = vector.extract_strided_slice %209 {offsets = [0, 5, 0], sizes = [8, 1, 10], strides = [1, 1, 1]} : vector<8x9x10xf32> to vector<8x1x10xf32>
    %236 = vector.shape_cast %235 : vector<8x1x10xf32> to vector<8x10xf32>
    %c5_191 = arith.constant 5 : index
    %c4_192 = arith.constant 4 : index
    %c0_193 = arith.constant 0 : index
    %c0_194 = arith.constant 0 : index
    %237 = vector.load %arg5[%c5_191, %c4_192, %c0_193, %c0_194] : memref<9x5x8x10xf32, #tpu.memory_space<vmem>>, vector<1x1x8x10xf32>
    %238 = vector.shape_cast %237 : vector<1x1x8x10xf32> to vector<8x10xf32>
    %239 = vector.shape_cast %236 : vector<8x10xf32> to vector<1x1x8x10xf32>
    tpu.vector_store %arg5[%c5_191, %c4_192, %c0_193, %c0_194], %239 {strides = array<i32>} : memref<9x5x8x10xf32, #tpu.memory_space<vmem>>, vector<1x1x8x10xf32>,
    %240 = vector.extract_strided_slice %209 {offsets = [0, 6, 0], sizes = [8, 1, 10], strides = [1, 1, 1]} : vector<8x9x10xf32> to vector<8x1x10xf32>
    %241 = vector.shape_cast %240 : vector<8x1x10xf32> to vector<8x10xf32>
    %c6_195 = arith.constant 6 : index
    %c4_196 = arith.constant 4 : index
    %c0_197 = arith.constant 0 : index
    %c0_198 = arith.constant 0 : index
    %242 = vector.load %arg5[%c6_195, %c4_196, %c0_197, %c0_198] : memref<9x5x8x10xf32, #tpu.memory_space<vmem>>, vector<1x1x8x10xf32>
    %243 = vector.shape_cast %242 : vector<1x1x8x10xf32> to vector<8x10xf32>
    %244 = vector.shape_cast %241 : vector<8x10xf32> to vector<1x1x8x10xf32>
    tpu.vector_store %arg5[%c6_195, %c4_196, %c0_197, %c0_198], %244 {strides = array<i32>} : memref<9x5x8x10xf32, #tpu.memory_space<vmem>>, vector<1x1x8x10xf32>,
    %245 = vector.extract_strided_slice %209 {offsets = [0, 7, 0], sizes = [8, 1, 10], strides = [1, 1, 1]} : vector<8x9x10xf32> to vector<8x1x10xf32>
    %246 = vector.shape_cast %245 : vector<8x1x10xf32> to vector<8x10xf32>
    %c7_199 = arith.constant 7 : index
    %c4_200 = arith.constant 4 : index
    %c0_201 = arith.constant 0 : index
    %c0_202 = arith.constant 0 : index
    %247 = vector.load %arg5[%c7_199, %c4_200, %c0_201, %c0_202] : memref<9x5x8x10xf32, #tpu.memory_space<vmem>>, vector<1x1x8x10xf32>
    %248 = vector.shape_cast %247 : vector<1x1x8x10xf32> to vector<8x10xf32>
    %249 = vector.shape_cast %246 : vector<8x10xf32> to vector<1x1x8x10xf32>
    tpu.vector_store %arg5[%c7_199, %c4_200, %c0_201, %c0_202], %249 {strides = array<i32>} : memref<9x5x8x10xf32, #tpu.memory_space<vmem>>, vector<1x1x8x10xf32>,
    %250 = vector.extract_strided_slice %209 {offsets = [0, 8, 0], sizes = [8, 1, 10], strides = [1, 1, 1]} : vector<8x9x10xf32> to vector<8x1x10xf32>
    %251 = vector.shape_cast %250 : vector<8x1x10xf32> to vector<8x10xf32>
    %c8_203 = arith.constant 8 : index
    %c4_204 = arith.constant 4 : index
    %c0_205 = arith.constant 0 : index
    %c0_206 = arith.constant 0 : index
    %252 = vector.load %arg5[%c8_203, %c4_204, %c0_205, %c0_206] : memref<9x5x8x10xf32, #tpu.memory_space<vmem>>, vector<1x1x8x10xf32>
    %253 = vector.shape_cast %252 : vector<1x1x8x10xf32> to vector<8x10xf32>
    %254 = vector.shape_cast %251 : vector<8x10xf32> to vector<1x1x8x10xf32>
    tpu.vector_store %arg5[%c8_203, %c4_204, %c0_205, %c0_206], %254 {strides = array<i32>} : memref<9x5x8x10xf32, #tpu.memory_space<vmem>>, vector<1x1x8x10xf32>,
    return
  }
}

</mosaic_0001>

<llo_original>
// kernel: tpu_custom_call.1
$region0: #{tpu_custom_call.1}
  #allocation0 [shape = 'u32[]', space=smem, size = 0x4, offset = 0x4, fixed_abs, tag = 'smem constant byte address 0x4 - core index']
  #allocation1 [shape = 'u32[144,128]{1,0:T(1,128)}', space=vmem, size = 0x12000, scoped, tag = 'internal scratch']
  %s0 = inlined_call_operand.vmem [shape: f32[3,16], index: 0, kind: input, shape index: {}]
  %s1 = inlined_call_operand.vmem [shape: f32[5,9,11], index: 1, kind: input, shape index: {}]
  %s2 = inlined_call_operand.vmem [shape: f32[8,5,9,10], index: 2, kind: input, shape index: {}]
  %s3 = inlined_call_operand.vmem [shape: f32[16,3], index: 3, kind: output, shape index: {0}]
  %s4 = inlined_call_operand.vmem [shape: f32[5,11,9], index: 4, kind: output, shape index: {1}]
  %s5 = inlined_call_operand.hbm [shape: f32[9,5,8,10], index: 5, kind: output, shape index: {2}]
  %6 = xla_tuple %s3, %s4, %s5
  %s7 = sld [smem:[#allocation0]]
  $region38: #{tpu_custom_call.1} parent=0
    _
  %s9 = ssub.s32 1, %s7
  %s10 = scalar_select 0, %s9, %s7
  $region1: #{tpu_custom_call.1} parent=0
    #allocation2 [shape = 'u8[184320]{0}', space=vmem, size = 0x2d000, scoped, tag = 'output window, operand 2, single buffered']
    #allocation3 [shape = 's32[1]{0}', space=sflag, size = 0x4, scoped, tag = 'scoped memory for tpu_custom_call.1']
    %11 = vsyncpa [#allocation3], 0
    // Predicated region
    $region2: #{tpu_custom_call.1} parent=1 // pred_check
      _
    $region3: #{tpu_custom_call.1} parent=1 // pred_check_branch
      %13 = sbr.rel (0) target = $region5
    $region4: #{tpu_custom_call.1} parent=1 // pred_region
      _
    $region5: #{tpu_custom_call.1} parent=1 // pred_fallthru
      _
    // Predicated region
    $region6: #{tpu_custom_call.1} parent=1 // pred_check
      _
    $region7: #{tpu_custom_call.1} parent=1 // pred_check_branch
      %15 = sbr.rel (0) target = $region9
    $region8: #{tpu_custom_call.1} parent=1 // pred_region
      _
    $region9: #{tpu_custom_call.1} parent=1 // pred_fallthru
      _
    // Predicated region
    $region10: #{tpu_custom_call.1} parent=1 // pred_check
      _
    $region11: #{tpu_custom_call.1} parent=1 // pred_check_branch
      %17 = sbr.rel (0) target = $region13
    $region12: #{tpu_custom_call.1} parent=1 // pred_region
      _
    $region13: #{tpu_custom_call.1} parent=1 // pred_fallthru
      _
    %v18 = vld [vmem:[%s0] sm:$0x7]
    %19 = vxpose.xlu0.b32.start [1/16] %v18, 128
    %20 = vxpose.xlu0.b32.cont [2/16] 0.0, 128
    %21 = vxpose.xlu0.b32.cont [3/16] 0.0, 128
    %22 = vxpose.xlu0.b32.cont [4/16] 0.0, 128
    %23 = vxpose.xlu0.b32.cont [5/16] 0.0, 128
    %24 = vxpose.xlu0.b32.cont [6/16] 0.0, 128
    %25 = vxpose.xlu0.b32.cont [7/16] 0.0, 128
    %26 = vxpose.xlu0.b32.cont [8/16] 0.0, 128
    %27 = vxpose.xlu0.b32.cont [9/16] 0.0, 128
    %28 = vxpose.xlu0.b32.cont [10/16] 0.0, 128
    %29 = vxpose.xlu0.b32.cont [11/16] 0.0, 128
    %30 = vxpose.xlu0.b32.cont [12/16] 0.0, 128
    %31 = vxpose.xlu0.b32.cont [13/16] 0.0, 128
    %32 = vxpose.xlu0.b32.cont [14/16] 0.0, 128
    %33 = vxpose.xlu0.b32.cont [15/16] 0.0, 128
    %34 = vxpose.xlu0.b32.end [16/16] 0.0, 128
    %v35 = vpop.trf.xlu0
    %v36 = vpop.trf.xlu0
    %v37 = vpop.trf.xlu0
    %v38 = vpop.trf.xlu0
    %v39 = vpop.trf.xlu0
    %v40 = vpop.trf.xlu0
    %v41 = vpop.trf.xlu0
    %v42 = vpop.trf.xlu0
    %v43 = vpop.trf.xlu0
    %v44 = vpop.trf.xlu0
    %v45 = vpop.trf.xlu0
    %v46 = vpop.trf.xlu0
    %v47 = vpop.trf.xlu0
    %v48 = vpop.trf.xlu0
    %v49 = vpop.trf.xlu0
    %v50 = vpop.trf.xlu0
    %v51 = vmax.f32 %v35, 0.0
    %v52 = vmax.f32 %v36, 0.0
    %vm53 = vcmask 23552
    %54 = vst.msk [vmem:[%s3] sm:$0xff] %vm53, %v51
    %55 = vst.msk [vmem:[%s3 + $0x8] sm:$0xff] %vm53, %v52
    %v56 = vld [vmem:[%s1] sm:$0xff]
    %v57 = vld [vmem:[%s1 + $0x8] sm:$0x1]
    %v58 = vld [vmem:[%s1 + $0x10] sm:$0xff]
    %v59 = vld [vmem:[%s1 + $0x18] sm:$0x1]
    %v60 = vld [vmem:[%s1 + $0x20] sm:$0xff]
    %v61 = vld [vmem:[%s1 + $0x28] sm:$0x1]
    %v62 = vld [vmem:[%s1 + $0x30] sm:$0xff]
    %v63 = vld [vmem:[%s1 + $0x38] sm:$0x1]
    %v64 = vld [vmem:[%s1 + $0x40] sm:$0xff]
    %v65 = vld [vmem:[%s1 + $0x48] sm:$0x1]
    %66 = vxpose.xlu0.b32.start [1/16] %v56, 128
    %67 = vxpose.xlu0.b32.cont [2/16] %v57, 128
    %68 = vxpose.xlu0.b32.cont [3/16] 0.0, 128
    %69 = vxpose.xlu0.b32.cont [4/16] 0.0, 128
    %70 = vxpose.xlu0.b32.cont [5/16] 0.0, 128
    %71 = vxpose.xlu0.b32.cont [6/16] 0.0, 128
    %72 = vxpose.xlu0.b32.cont [7/16] 0.0, 128
    %73 = vxpose.xlu0.b32.cont [8/16] 0.0, 128
    %74 = vxpose.xlu0.b32.cont [9/16] 0.0, 128
    %75 = vxpose.xlu0.b32.cont [10/16] 0.0, 128
    %76 = vxpose.xlu0.b32.cont [11/16] 0.0, 128
    %77 = vxpose.xlu0.b32.cont [12/16] 0.0, 128
    %78 = vxpose.xlu0.b32.cont [13/16] 0.0, 128
    %79 = vxpose.xlu0.b32.cont [14/16] 0.0, 128
    %80 = vxpose.xlu0.b32.cont [15/16] 0.0, 128
    %81 = vxpose.xlu0.b32.end [16/16] 0.0, 128
    %v82 = vpop.trf.xlu0
    %v83 = vpop.trf.xlu0
    %v84 = vpop.trf.xlu0
    %v85 = vpop.trf.xlu0
    %v86 = vpop.trf.xlu0
    %v87 = vpop.trf.xlu0
    %v88 = vpop.trf.xlu0
    %v89 = vpop.trf.xlu0
    %v90 = vpop.trf.xlu0
    %v91 = vpop.trf.xlu0
    %v92 = vpop.trf.xlu0
    %v93 = vpop.trf.xlu0
    %v94 = vpop.trf.xlu0
    %v95 = vpop.trf.xlu0
    %v96 = vpop.trf.xlu0
    %v97 = vpop.trf.xlu0
    %98 = vxpose.xlu0.b32.start [1/16] %v58, 128
    %99 = vxpose.xlu0.b32.cont [2/16] %v59, 128
    %100 = vxpose.xlu0.b32.cont [3/16] 0.0, 128
    %101 = vxpose.xlu0.b32.cont [4/16] 0.0, 128
    %102 = vxpose.xlu0.b32.cont [5/16] 0.0, 128
    %103 = vxpose.xlu0.b32.cont [6/16] 0.0, 128
    %104 = vxpose.xlu0.b32.cont [7/16] 0.0, 128
    %105 = vxpose.xlu0.b32.cont [8/16] 0.0, 128
    %106 = vxpose.xlu0.b32.cont [9/16] 0.0, 128
    %107 = vxpose.xlu0.b32.cont [10/16] 0.0, 128
    %108 = vxpose.xlu0.b32.cont [11/16] 0.0, 128
    %109 = vxpose.xlu0.b32.cont [12/16] 0.0, 128
    %110 = vxpose.xlu0.b32.cont [13/16] 0.0, 128
    %111 = vxpose.xlu0.b32.cont [14/16] 0.0, 128
    %112 = vxpose.xlu0.b32.cont [15/16] 0.0, 128
    %113 = vxpose.xlu0.b32.end [16/16] 0.0, 128
    %v114 = vpop.trf.xlu0
    %v115 = vpop.trf.xlu0
    %v116 = vpop.trf.xlu0
    %v117 = vpop.trf.xlu0
    %v118 = vpop.trf.xlu0
    %v119 = vpop.trf.xlu0
    %v120 = vpop.trf.xlu0
    %v121 = vpop.trf.xlu0
    %v122 = vpop.trf.xlu0
    %v123 = vpop.trf.xlu0
    %v124 = vpop.trf.xlu0
    %v125 = vpop.trf.xlu0
    %v126 = vpop.trf.xlu0
    %v127 = vpop.trf.xlu0
    %v128 = vpop.trf.xlu0
    %v129 = vpop.trf.xlu0
    %130 = vxpose.xlu0.b32.start [1/16] %v60, 128
    %131 = vxpose.xlu0.b32.cont [2/16] %v61, 128
    %132 = vxpose.xlu0.b32.cont [3/16] 0.0, 128
    %133 = vxpose.xlu0.b32.cont [4/16] 0.0, 128
    %134 = vxpose.xlu0.b32.cont [5/16] 0.0, 128
    %135 = vxpose.xlu0.b32.cont [6/16] 0.0, 128
    %136 = vxpose.xlu0.b32.cont [7/16] 0.0, 128
    %137 = vxpose.xlu0.b32.cont [8/16] 0.0, 128
    %138 = vxpose.xlu0.b32.cont [9/16] 0.0, 128
    %139 = vxpose.xlu0.b32.cont [10/16] 0.0, 128
    %140 = vxpose.xlu0.b32.cont [11/16] 0.0, 128
    %141 = vxpose.xlu0.b32.cont [12/16] 0.0, 128
    %142 = vxpose.xlu0.b32.cont [13/16] 0.0, 128
    %143 = vxpose.xlu0.b32.cont [14/16] 0.0, 128
    %144 = vxpose.xlu0.b32.cont [15/16] 0.0, 128
    %145 = vxpose.xlu0.b32.end [16/16] 0.0, 128
    %v146 = vpop.trf.xlu0
    %v147 = vpop.trf.xlu0
    %v148 = vpop.trf.xlu0
    %v149 = vpop.trf.xlu0
    %v150 = vpop.trf.xlu0
    %v151 = vpop.trf.xlu0
    %v152 = vpop.trf.xlu0
    %v153 = vpop.trf.xlu0
    %v154 = vpop.trf.xlu0
    %v155 = vpop.trf.xlu0
    %v156 = vpop.trf.xlu0
    %v157 = vpop.trf.xlu0
    %v158 = vpop.trf.xlu0
    %v159 = vpop.trf.xlu0
    %v160 = vpop.trf.xlu0
    %v161 = vpop.trf.xlu0
    %162 = vxpose.xlu0.b32.start [1/16] %v62, 128
    %163 = vxpose.xlu0.b32.cont [2/16] %v63, 128
    %164 = vxpose.xlu0.b32.cont [3/16] 0.0, 128
    %165 = vxpose.xlu0.b32.cont [4/16] 0.0, 128
    %166 = vxpose.xlu0.b32.cont [5/16] 0.0, 128
    %167 = vxpose.xlu0.b32.cont [6/16] 0.0, 128
    %168 = vxpose.xlu0.b32.cont [7/16] 0.0, 128
    %169 = vxpose.xlu0.b32.cont [8/16] 0.0, 128
    %170 = vxpose.xlu0.b32.cont [9/16] 0.0, 128
    %171 = vxpose.xlu0.b32.cont [10/16] 0.0, 128
    %172 = vxpose.xlu0.b32.cont [11/16] 0.0, 128
    %173 = vxpose.xlu0.b32.cont [12/16] 0.0, 128
    %174 = vxpose.xlu0.b32.cont [13/16] 0.0, 128
    %175 = vxpose.xlu0.b32.cont [14/16] 0.0, 128
    %176 = vxpose.xlu0.b32.cont [15/16] 0.0, 128
    %177 = vxpose.xlu0.b32.end [16/16] 0.0, 128
    %v178 = vpop.trf.xlu0
    %v179 = vpop.trf.xlu0
    %v180 = vpop.trf.xlu0
    %v181 = vpop.trf.xlu0
    %v182 = vpop.trf.xlu0
    %v183 = vpop.trf.xlu0
    %v184 = vpop.trf.xlu0
    %v185 = vpop.trf.xlu0
    %v186 = vpop.trf.xlu0
    %v187 = vpop.trf.xlu0
    %v188 = vpop.trf.xlu0
    %v189 = vpop.trf.xlu0
    %v190 = vpop.trf.xlu0
    %v191 = vpop.trf.xlu0
    %v192 = vpop.trf.xlu0
    %v193 = vpop.trf.xlu0
    %194 = vxpose.xlu0.b32.start [1/16] %v64, 128
    %195 = vxpose.xlu0.b32.cont [2/16] %v65, 128
    %196 = vxpose.xlu0.b32.cont [3/16] 0.0, 128
    %197 = vxpose.xlu0.b32.cont [4/16] 0.0, 128
    %198 = vxpose.xlu0.b32.cont [5/16] 0.0, 128
    %199 = vxpose.xlu0.b32.cont [6/16] 0.0, 128
    %200 = vxpose.xlu0.b32.cont [7/16] 0.0, 128
    %201 = vxpose.xlu0.b32.cont [8/16] 0.0, 128
    %202 = vxpose.xlu0.b32.cont [9/16] 0.0, 128
    %203 = vxpose.xlu0.b32.cont [10/16] 0.0, 128
    %204 = vxpose.xlu0.b32.cont [11/16] 0.0, 128
    %205 = vxpose.xlu0.b32.cont [12/16] 0.0, 128
    %206 = vxpose.xlu0.b32.cont [13/16] 0.0, 128
    %207 = vxpose.xlu0.b32.cont [14/16] 0.0, 128
    %208 = vxpose.xlu0.b32.cont [15/16] 0.0, 128
    %209 = vxpose.xlu0.b32.end [16/16] 0.0, 128
    %v210 = vpop.trf.xlu0
    %v211 = vpop.trf.xlu0
    %v212 = vpop.trf.xlu0
    %v213 = vpop.trf.xlu0
    %v214 = vpop.trf.xlu0
    %v215 = vpop.trf.xlu0
    %v216 = vpop.trf.xlu0
    %v217 = vpop.trf.xlu0
    %v218 = vpop.trf.xlu0
    %v219 = vpop.trf.xlu0
    %v220 = vpop.trf.xlu0
    %v221 = vpop.trf.xlu0
    %v222 = vpop.trf.xlu0
    %v223 = vpop.trf.xlu0
    %v224 = vpop.trf.xlu0
    %v225 = vpop.trf.xlu0
    %v226 = vmax.f32 %v82, 0.0
    %v227 = vmax.f32 %v83, 0.0
    %v228 = vmax.f32 %v114, 0.0
    %v229 = vmax.f32 %v115, 0.0
    %v230 = vmax.f32 %v146, 0.0
    %v231 = vmax.f32 %v147, 0.0
    %v232 = vmax.f32 %v178, 0.0
    %v233 = vmax.f32 %v179, 0.0
    %v234 = vmax.f32 %v210, 0.0
    %v235 = vmax.f32 %v211, 0.0
    %vm236 = vcmask 72704
    %237 = vst.msk [vmem:[%s4] sm:$0xff] %vm236, %v226
    %vm238 = vcmask 67584
    %239 = vst.msk [vmem:[%s4 + $0x8] sm:$0x7] %vm238, %v227
    %240 = vst.msk [vmem:[%s4 + $0x10] sm:$0xff] %vm236, %v228
    %241 = vst.msk [vmem:[%s4 + $0x18] sm:$0x7] %vm238, %v229
    %242 = vst.msk [vmem:[%s4 + $0x20] sm:$0xff] %vm236, %v230
    %243 = vst.msk [vmem:[%s4 + $0x28] sm:$0x7] %vm238, %v231
    %244 = vst.msk [vmem:[%s4 + $0x30] sm:$0xff] %vm236, %v232
    %245 = vst.msk [vmem:[%s4 + $0x38] sm:$0x7] %vm238, %v233
    %246 = vst.msk [vmem:[%s4 + $0x40] sm:$0xff] %vm236, %v234
    %247 = vst.msk [vmem:[%s4 + $0x48] sm:$0x7] %vm238, %v235
    %v248 = vld [vmem:[%s2] sm:$0xff]
    %v249 = vld [vmem:[%s2 + $0x8] sm:$0x1]
    %v250 = vld [vmem:[%s2 + $0x50] sm:$0xff]
    %v251 = vld [vmem:[%s2 + $0x58] sm:$0x1]
    %v252 = vld [vmem:[%s2 + $0xa0] sm:$0xff]
    %v253 = vld [vmem:[%s2 + $0xa8] sm:$0x1]
    %v254 = vld [vmem:[%s2 + $0xf0] sm:$0xff]
    %v255 = vld [vmem:[%s2 + $0xf8] sm:$0x1]
    %v256 = vld [vmem:[%s2 + $0x140] sm:$0xff]
    %v257 = vld [vmem:[%s2 + $0x148] sm:$0x1]
    %v258 = vld [vmem:[%s2 + $0x190] sm:$0xff]
    %v259 = vld [vmem:[%s2 + $0x198] sm:$0x1]
    %v260 = vld [vmem:[%s2 + $0x1e0] sm:$0xff]
    %v261 = vld [vmem:[%s2 + $0x1e8] sm:$0x1]
    %v262 = vld [vmem:[%s2 + $0x230] sm:$0xff]
    %v263 = vld [vmem:[%s2 + $0x238] sm:$0x1]
    %v264 = vmax.f32 %v248, 0.0
    %v265 = vmax.f32 %v249, 0.0
    %v266 = vmax.f32 %v250, 0.0
    %v267 = vmax.f32 %v251, 0.0
    %v268 = vmax.f32 %v252, 0.0
    %v269 = vmax.f32 %v253, 0.0
    %v270 = vmax.f32 %v254, 0.0
    %v271 = vmax.f32 %v255, 0.0
    %v272 = vmax.f32 %v256, 0.0
    %v273 = vmax.f32 %v257, 0.0
    %v274 = vmax.f32 %v258, 0.0
    %v275 = vmax.f32 %v259, 0.0
    %v276 = vmax.f32 %v260, 0.0
    %v277 = vmax.f32 %v261, 0.0
    %v278 = vmax.f32 %v262, 0.0
    %v279 = vmax.f32 %v263, 0.0
    %v288 = vrot.slane %v266, 7
    %vm289 = vcmask 1041409
    %v290 = vsel %vm289, %v288, %v264
    %v291 = vrot.slane %v268, 6
    %vm292 = vcmask 1042434
    %v293 = vsel %vm292, %v291, %v290
    %v294 = vrot.slane %v270, 5
    %vm295 = vcmask 1043459
    %v296 = vsel %vm295, %v294, %v293
    %v297 = vrot.slane %v272, 4
    %vm298 = vcmask 1044484
    %v299 = vsel %vm298, %v297, %v296
    %v300 = vrot.slane %v274, 3
    %vm301 = vcmask 1045509
    %v302 = vsel %vm301, %v300, %v299
    %v303 = vrot.slane %v276, 2
    %vm304 = vcmask 1046534
    %v305 = vsel %vm304, %v303, %v302
    %v306 = vrot.slane %v278, 1
    %vm307 = vcmask 1047559
    %v308 = vsel %vm307, %v306, %v305
    %vm310 = vcmask 80896
    %311 = vst.msk [vmem:[#allocation2] sm:$0xff] %vm310, %v308
    %v312 = vsel %vm292, %v288, %v264
    %v313 = vsel %vm295, %v291, %v312
    %v314 = vsel %vm298, %v294, %v313
    %v315 = vsel %vm301, %v297, %v314
    %v316 = vsel %vm304, %v300, %v315
    %v317 = vsel %vm307, %v303, %v316
    %s320 = scalar_lea.vmem [#allocation2], 40
    %vm321 = vcmask 80897
    %322 = vst.msk [vmem:[%s320 - $0x1] sm:$0xfe] %vm321, %v317
    %vm323 = vcmask 73728
    %324 = vst.msk [vmem:[%s320 + $0x7] sm:$0x1] %vm323, %v306
    %v325 = vsel %vm295, %v288, %v264
    %v326 = vsel %vm298, %v291, %v325
    %v327 = vsel %vm301, %v294, %v326
    %v328 = vsel %vm304, %v297, %v327
    %v329 = vsel %vm307, %v300, %v328
    %v330 = vsel %vm289, %v306, %v303
    %s333 = scalar_lea.vmem [#allocation2], 80
    %vm334 = vcmask 80898
    %335 = vst.msk [vmem:[%s333 - $0x2] sm:$0xfc] %vm334, %v329
    %vm336 = vcmask 74752
    %337 = vst.msk [vmem:[%s333 + $0x6] sm:$0x3] %vm336, %v330
    %v338 = vsel %vm298, %v288, %v264
    %v339 = vsel %vm301, %v291, %v338
    %v340 = vsel %vm304, %v294, %v339
    %v341 = vsel %vm307, %v297, %v340
    %v342 = vsel %vm289, %v303, %v300
    %v343 = vsel %vm292, %v306, %v342
    %s346 = scalar_lea.vmem [#allocation2], 120
    %vm347 = vcmask 80899
    %348 = vst.msk [vmem:[%s346 - $0x3] sm:$0xf8] %vm347, %v341
    %vm349 = vcmask 75776
    %350 = vst.msk [vmem:[%s346 + $0x5] sm:$0x7] %vm349, %v343
    %v351 = vsel %vm301, %v288, %v264
    %v352 = vsel %vm304, %v291, %v351
    %v353 = vsel %vm307, %v294, %v352
    %v354 = vsel %vm289, %v300, %v297
    %v355 = vsel %vm292, %v303, %v354
    %v356 = vsel %vm295, %v306, %v355
    %s359 = scalar_lea.vmem [#allocation2], 160
    %vm360 = vcmask 80900
    %361 = vst.msk [vmem:[%s359 - $0x4] sm:$0xf0] %vm360, %v353
    %vm362 = vcmask 76800
    %363 = vst.msk [vmem:[%s359 + $0x4] sm:$0xf] %vm362, %v356
    %v364 = vsel %vm304, %v288, %v264
    %v365 = vsel %vm307, %v291, %v364
    %v366 = vsel %vm289, %v297, %v294
    %v367 = vsel %vm292, %v300, %v366
    %v368 = vsel %vm295, %v303, %v367
    %v369 = vsel %vm298, %v306, %v368
    %s372 = scalar_lea.vmem [#allocation2], 200
    %vm373 = vcmask 80901
    %374 = vst.msk [vmem:[%s372 - $0x5] sm:$0xe0] %vm373, %v365
    %vm375 = vcmask 77824
    %376 = vst.msk [vmem:[%s372 + $0x3] sm:$0x1f] %vm375, %v369
    %v377 = vsel %vm307, %v288, %v264
    %v378 = vsel %vm289, %v294, %v291
    %v379 = vsel %vm292, %v297, %v378
    %v380 = vsel %vm295, %v300, %v379
    %v381 = vsel %vm298, %v303, %v380
    %v382 = vsel %vm301, %v306, %v381
    %s385 = scalar_lea.vmem [#allocation2], 240
    %vm386 = vcmask 80902
    %387 = vst.msk [vmem:[%s385 - $0x6] sm:$0xc0] %vm386, %v377
    %vm388 = vcmask 78848
    %389 = vst.msk [vmem:[%s385 + $0x2] sm:$0x3f] %vm388, %v382
    %v390 = vsel %vm289, %v291, %v288
    %v391 = vsel %vm292, %v294, %v390
    %v392 = vsel %vm295, %v297, %v391
    %v393 = vsel %vm298, %v300, %v392
    %v394 = vsel %vm301, %v303, %v393
    %v395 = vsel %vm304, %v306, %v394
    %s398 = scalar_lea.vmem [#allocation2], 280
    %vm399 = vcmask 80903
    %400 = vst.msk [vmem:[%s398 - $0x7] sm:$0x80] %vm399, %v264
    %vm401 = vcmask 79872
    %402 = vst.msk [vmem:[%s398 + $0x1] sm:$0x7f] %vm401, %v395
    %v411 = vrot.slane %v267, 7
    %v412 = vsel %vm289, %v411, %v265
    %v413 = vrot.slane %v269, 6
    %v414 = vsel %vm292, %v413, %v412
    %v415 = vrot.slane %v271, 5
    %v416 = vsel %vm295, %v415, %v414
    %v417 = vrot.slane %v273, 4
    %v418 = vsel %vm298, %v417, %v416
    %v419 = vrot.slane %v275, 3
    %v420 = vsel %vm301, %v419, %v418
    %v421 = vrot.slane %v277, 2
    %v422 = vsel %vm304, %v421, %v420
    %v423 = vrot.slane %v279, 1
    %v424 = vsel %vm307, %v423, %v422
    %s426 = scalar_lea.vmem [#allocation2], 320
    %427 = vst.msk [vmem:[%s426] sm:$0xff] %vm310, %v424
    %s428 = scalar_lea.vmem %s2, 16
    %v429 = vld [vmem:[%s428] sm:$0xff]
    %v430 = vld [vmem:[%s428 + $0x8] sm:$0x1]
    %v431 = vld [vmem:[%s428 + $0x50] sm:$0xff]
    %v432 = vld [vmem:[%s428 + $0x58] sm:$0x1]
    %v433 = vld [vmem:[%s428 + $0xa0] sm:$0xff]
    %v434 = vld [vmem:[%s428 + $0xa8] sm:$0x1]
    %v435 = vld [vmem:[%s428 + $0xf0] sm:$0xff]
    %v436 = vld [vmem:[%s428 + $0xf8] sm:$0x1]
    %v437 = vld [vmem:[%s428 + $0x140] sm:$0xff]
    %v438 = vld [vmem:[%s428 + $0x148] sm:$0x1]
    %v439 = vld [vmem:[%s428 + $0x190] sm:$0xff]
    %v440 = vld [vmem:[%s428 + $0x198] sm:$0x1]
    %v441 = vld [vmem:[%s428 + $0x1e0] sm:$0xff]
    %v442 = vld [vmem:[%s428 + $0x1e8] sm:$0x1]
    %v443 = vld [vmem:[%s428 + $0x230] sm:$0xff]
    %v444 = vld [vmem:[%s428 + $0x238] sm:$0x1]
    %v445 = vmax.f32 %v429, 0.0
    %v446 = vmax.f32 %v430, 0.0
    %v447 = vmax.f32 %v431, 0.0
    %v448 = vmax.f32 %v432, 0.0
    %v449 = vmax.f32 %v433, 0.0
    %v450 = vmax.f32 %v434, 0.0
    %v451 = vmax.f32 %v435, 0.0
    %v452 = vmax.f32 %v436, 0.0
    %v453 = vmax.f32 %v437, 0.0
    %v454 = vmax.f32 %v438, 0.0
    %v455 = vmax.f32 %v439, 0.0
    %v456 = vmax.f32 %v440, 0.0
    %v457 = vmax.f32 %v441, 0.0
    %v458 = vmax.f32 %v442, 0.0
    %v459 = vmax.f32 %v443, 0.0
    %v460 = vmax.f32 %v444, 0.0
    %v469 = vrot.slane %v447, 7
    %v470 = vsel %vm289, %v469, %v445
    %v471 = vrot.slane %v449, 6
    %v472 = vsel %vm292, %v471, %v470
    %v473 = vrot.slane %v451, 5
    %v474 = vsel %vm295, %v473, %v472
    %v475 = vrot.slane %v453, 4
    %v476 = vsel %vm298, %v475, %v474
    %v477 = vrot.slane %v455, 3
    %v478 = vsel %vm301, %v477, %v476
    %v479 = vrot.slane %v457, 2
    %v480 = vsel %vm304, %v479, %v478
    %v481 = vrot.slane %v459, 1
    %v482 = vsel %vm307, %v481, %v480
    %s484 = scalar_lea.vmem [#allocation2], 8
    %485 = vst.msk [vmem:[%s484] sm:$0xff] %vm310, %v482
    %v486 = vsel %vm292, %v469, %v445
    %v487 = vsel %vm295, %v471, %v486
    %v488 = vsel %vm298, %v473, %v487
    %v489 = vsel %vm301, %v475, %v488
    %v490 = vsel %vm304, %v477, %v489
    %v491 = vsel %vm307, %v479, %v490
    %s494 = scalar_lea.vmem [#allocation2], 48
    %495 = vst.msk [vmem:[%s494 - $0x1] sm:$0xfe] %vm321, %v491
    %496 = vst.msk [vmem:[%s494 + $0x7] sm:$0x1] %vm323, %v481
    %v497 = vsel %vm295, %v469, %v445
    %v498 = vsel %vm298, %v471, %v497
    %v499 = vsel %vm301, %v473, %v498
    %v500 = vsel %vm304, %v475, %v499
    %v501 = vsel %vm307, %v477, %v500
    %v502 = vsel %vm289, %v481, %v479
    %s505 = scalar_lea.vmem [#allocation2], 88
    %506 = vst.msk [vmem:[%s505 - $0x2] sm:$0xfc] %vm334, %v501
    %507 = vst.msk [vmem:[%s505 + $0x6] sm:$0x3] %vm336, %v502
    %v508 = vsel %vm298, %v469, %v445
    %v509 = vsel %vm301, %v471, %v508
    %v510 = vsel %vm304, %v473, %v509
    %v511 = vsel %vm307, %v475, %v510
    %v512 = vsel %vm289, %v479, %v477
    %v513 = vsel %vm292, %v481, %v512
    %s516 = scalar_lea.vmem [#allocation2], 128
    %517 = vst.msk [vmem:[%s516 - $0x3] sm:$0xf8] %vm347, %v511
    %518 = vst.msk [vmem:[%s516 + $0x5] sm:$0x7] %vm349, %v513
    %v519 = vsel %vm301, %v469, %v445
    %v520 = vsel %vm304, %v471, %v519
    %v521 = vsel %vm307, %v473, %v520
    %v522 = vsel %vm289, %v477, %v475
    %v523 = vsel %vm292, %v479, %v522
    %v524 = vsel %vm295, %v481, %v523
    %s527 = scalar_lea.vmem [#allocation2], 168
    %528 = vst.msk [vmem:[%s527 - $0x4] sm:$0xf0] %vm360, %v521
    %529 = vst.msk [vmem:[%s527 + $0x4] sm:$0xf] %vm362, %v524
    %v530 = vsel %vm304, %v469, %v445
    %v531 = vsel %vm307, %v471, %v530
    %v532 = vsel %vm289, %v475, %v473
    %v533 = vsel %vm292, %v477, %v532
    %v534 = vsel %vm295, %v479, %v533
    %v535 = vsel %vm298, %v481, %v534
    %s538 = scalar_lea.vmem [#allocation2], 208
    %539 = vst.msk [vmem:[%s538 - $0x5] sm:$0xe0] %vm373, %v531
    %540 = vst.msk [vmem:[%s538 + $0x3] sm:$0x1f] %vm375, %v535
    %v541 = vsel %vm307, %v469, %v445
    %v542 = vsel %vm289, %v473, %v471
    %v543 = vsel %vm292, %v475, %v542
    %v544 = vsel %vm295, %v477, %v543
    %v545 = vsel %vm298, %v479, %v544
    %v546 = vsel %vm301, %v481, %v545
    %s549 = scalar_lea.vmem [#allocation2], 248
    %550 = vst.msk [vmem:[%s549 - $0x6] sm:$0xc0] %vm386, %v541
    %551 = vst.msk [vmem:[%s549 + $0x2] sm:$0x3f] %vm388, %v546
    %v552 = vsel %vm289, %v471, %v469
    %v553 = vsel %vm292, %v473, %v552
    %v554 = vsel %vm295, %v475, %v553
    %v555 = vsel %vm298, %v477, %v554
    %v556 = vsel %vm301, %v479, %v555
    %v557 = vsel %vm304, %v481, %v556
    %s560 = scalar_lea.vmem [#allocation2], 288
    %561 = vst.msk [vmem:[%s560 - $0x7] sm:$0x80] %vm399, %v445
    %562 = vst.msk [vmem:[%s560 + $0x1] sm:$0x7f] %vm401, %v557
    %v571 = vrot.slane %v448, 7
    %v572 = vsel %vm289, %v571, %v446
    %v573 = vrot.slane %v450, 6
    %v574 = vsel %vm292, %v573, %v572
    %v575 = vrot.slane %v452, 5
    %v576 = vsel %vm295, %v575, %v574
    %v577 = vrot.slane %v454, 4
    %v578 = vsel %vm298, %v577, %v576
    %v579 = vrot.slane %v456, 3
    %v580 = vsel %vm301, %v579, %v578
    %v581 = vrot.slane %v458, 2
    %v582 = vsel %vm304, %v581, %v580
    %v583 = vrot.slane %v460, 1
    %v584 = vsel %vm307, %v583, %v582
    %s586 = scalar_lea.vmem [#allocation2], 328
    %587 = vst.msk [vmem:[%s586] sm:$0xff] %vm310, %v584
    %s588 = scalar_lea.vmem %s2, 32
    %v589 = vld [vmem:[%s588] sm:$0xff]
    %v590 = vld [vmem:[%s588 + $0x8] sm:$0x1]
    %v591 = vld [vmem:[%s588 + $0x50] sm:$0xff]
    %v592 = vld [vmem:[%s588 + $0x58] sm:$0x1]
    %v593 = vld [vmem:[%s588 + $0xa0] sm:$0xff]
    %v594 = vld [vmem:[%s588 + $0xa8] sm:$0x1]
    %v595 = vld [vmem:[%s588 + $0xf0] sm:$0xff]
    %v596 = vld [vmem:[%s588 + $0xf8] sm:$0x1]
    %v597 = vld [vmem:[%s588 + $0x140] sm:$0xff]
    %v598 = vld [vmem:[%s588 + $0x148] sm:$0x1]
    %v599 = vld [vmem:[%s588 + $0x190] sm:$0xff]
    %v600 = vld [vmem:[%s588 + $0x198] sm:$0x1]
    %v601 = vld [vmem:[%s588 + $0x1e0] sm:$0xff]
    %v602 = vld [vmem:[%s588 + $0x1e8] sm:$0x1]
    %v603 = vld [vmem:[%s588 + $0x230] sm:$0xff]
    %v604 = vld [vmem:[%s588 + $0x238] sm:$0x1]
    %v605 = vmax.f32 %v589, 0.0
    %v606 = vmax.f32 %v590, 0.0
    %v607 = vmax.f32 %v591, 0.0
    %v608 = vmax.f32 %v592, 0.0
    %v609 = vmax.f32 %v593, 0.0
    %v610 = vmax.f32 %v594, 0.0
    %v611 = vmax.f32 %v595, 0.0
    %v612 = vmax.f32 %v596, 0.0
    %v613 = vmax.f32 %v597, 0.0
    %v614 = vmax.f32 %v598, 0.0
    %v615 = vmax.f32 %v599, 0.0
    %v616 = vmax.f32 %v600, 0.0
    %v617 = vmax.f32 %v601, 0.0
    %v618 = vmax.f32 %v602, 0.0
    %v619 = vmax.f32 %v603, 0.0
    %v620 = vmax.f32 %v604, 0.0
    %v629 = vrot.slane %v607, 7
    %v630 = vsel %vm289, %v629, %v605
    %v631 = vrot.slane %v609, 6
    %v632 = vsel %vm292, %v631, %v630
    %v633 = vrot.slane %v611, 5
    %v634 = vsel %vm295, %v633, %v632
    %v635 = vrot.slane %v613, 4
    %v636 = vsel %vm298, %v635, %v634
    %v637 = vrot.slane %v615, 3
    %v638 = vsel %vm301, %v637, %v636
    %v639 = vrot.slane %v617, 2
    %v640 = vsel %vm304, %v639, %v638
    %v641 = vrot.slane %v619, 1
    %v642 = vsel %vm307, %v641, %v640
    %s644 = scalar_lea.vmem [#allocation2], 16
    %645 = vst.msk [vmem:[%s644] sm:$0xff] %vm310, %v642
    %v646 = vsel %vm292, %v629, %v605
    %v647 = vsel %vm295, %v631, %v646
    %v648 = vsel %vm298, %v633, %v647
    %v649 = vsel %vm301, %v635, %v648
    %v650 = vsel %vm304, %v637, %v649
    %v651 = vsel %vm307, %v639, %v650
    %s654 = scalar_lea.vmem [#allocation2], 56
    %655 = vst.msk [vmem:[%s654 - $0x1] sm:$0xfe] %vm321, %v651
    %656 = vst.msk [vmem:[%s654 + $0x7] sm:$0x1] %vm323, %v641
    %v657 = vsel %vm295, %v629, %v605
    %v658 = vsel %vm298, %v631, %v657
    %v659 = vsel %vm301, %v633, %v658
    %v660 = vsel %vm304, %v635, %v659
    %v661 = vsel %vm307, %v637, %v660
    %v662 = vsel %vm289, %v641, %v639
    %s665 = scalar_lea.vmem [#allocation2], 96
    %666 = vst.msk [vmem:[%s665 - $0x2] sm:$0xfc] %vm334, %v661
    %667 = vst.msk [vmem:[%s665 + $0x6] sm:$0x3] %vm336, %v662
    %v668 = vsel %vm298, %v629, %v605
    %v669 = vsel %vm301, %v631, %v668
    %v670 = vsel %vm304, %v633, %v669
    %v671 = vsel %vm307, %v635, %v670
    %v672 = vsel %vm289, %v639, %v637
    %v673 = vsel %vm292, %v641, %v672
    %s676 = scalar_lea.vmem [#allocation2], 136
    %677 = vst.msk [vmem:[%s676 - $0x3] sm:$0xf8] %vm347, %v671
    %678 = vst.msk [vmem:[%s676 + $0x5] sm:$0x7] %vm349, %v673
    %v679 = vsel %vm301, %v629, %v605
    %v680 = vsel %vm304, %v631, %v679
    %v681 = vsel %vm307, %v633, %v680
    %v682 = vsel %vm289, %v637, %v635
    %v683 = vsel %vm292, %v639, %v682
    %v684 = vsel %vm295, %v641, %v683
    %s687 = scalar_lea.vmem [#allocation2], 176
    %688 = vst.msk [vmem:[%s687 - $0x4] sm:$0xf0] %vm360, %v681
    %689 = vst.msk [vmem:[%s687 + $0x4] sm:$0xf] %vm362, %v684
    %v690 = vsel %vm304, %v629, %v605
    %v691 = vsel %vm307, %v631, %v690
    %v692 = vsel %vm289, %v635, %v633
    %v693 = vsel %vm292, %v637, %v692
    %v694 = vsel %vm295, %v639, %v693
    %v695 = vsel %vm298, %v641, %v694
    %s698 = scalar_lea.vmem [#allocation2], 216
    %699 = vst.msk [vmem:[%s698 - $0x5] sm:$0xe0] %vm373, %v691
    %700 = vst.msk [vmem:[%s698 + $0x3] sm:$0x1f] %vm375, %v695
    %v701 = vsel %vm307, %v629, %v605
    %v702 = vsel %vm289, %v633, %v631
    %v703 = vsel %vm292, %v635, %v702
    %v704 = vsel %vm295, %v637, %v703
    %v705 = vsel %vm298, %v639, %v704
    %v706 = vsel %vm301, %v641, %v705
    %s709 = scalar_lea.vmem [#allocation2], 256
    %710 = vst.msk [vmem:[%s709 - $0x6] sm:$0xc0] %vm386, %v701
    %711 = vst.msk [vmem:[%s709 + $0x2] sm:$0x3f] %vm388, %v706
    %v712 = vsel %vm289, %v631, %v629
    %v713 = vsel %vm292, %v633, %v712
    %v714 = vsel %vm295, %v635, %v713
    %v715 = vsel %vm298, %v637, %v714
    %v716 = vsel %vm301, %v639, %v715
    %v717 = vsel %vm304, %v641, %v716
    %s720 = scalar_lea.vmem [#allocation2], 296
    %721 = vst.msk [vmem:[%s720 - $0x7] sm:$0x80] %vm399, %v605
    %722 = vst.msk [vmem:[%s720 + $0x1] sm:$0x7f] %vm401, %v717
    %v731 = vrot.slane %v608, 7
    %v732 = vsel %vm289, %v731, %v606
    %v733 = vrot.slane %v610, 6
    %v734 = vsel %vm292, %v733, %v732
    %v735 = vrot.slane %v612, 5
    %v736 = vsel %vm295, %v735, %v734
    %v737 = vrot.slane %v614, 4
    %v738 = vsel %vm298, %v737, %v736
    %v739 = vrot.slane %v616, 3
    %v740 = vsel %vm301, %v739, %v738
    %v741 = vrot.slane %v618, 2
    %v742 = vsel %vm304, %v741, %v740
    %v743 = vrot.slane %v620, 1
    %v744 = vsel %vm307, %v743, %v742
    %s746 = scalar_lea.vmem [#allocation2], 336
    %747 = vst.msk [vmem:[%s746] sm:$0xff] %vm310, %v744
    %s748 = scalar_lea.vmem %s2, 48
    %v749 = vld [vmem:[%s748] sm:$0xff]
    %v750 = vld [vmem:[%s748 + $0x8] sm:$0x1]
    %v751 = vld [vmem:[%s748 + $0x50] sm:$0xff]
    %v752 = vld [vmem:[%s748 + $0x58] sm:$0x1]
    %v753 = vld [vmem:[%s748 + $0xa0] sm:$0xff]
    %v754 = vld [vmem:[%s748 + $0xa8] sm:$0x1]
    %v755 = vld [vmem:[%s748 + $0xf0] sm:$0xff]
    %v756 = vld [vmem:[%s748 + $0xf8] sm:$0x1]
    %v757 = vld [vmem:[%s748 + $0x140] sm:$0xff]
    %v758 = vld [vmem:[%s748 + $0x148] sm:$0x1]
    %v759 = vld [vmem:[%s748 + $0x190] sm:$0xff]
    %v760 = vld [vmem:[%s748 + $0x198] sm:$0x1]
    %v761 = vld [vmem:[%s748 + $0x1e0] sm:$0xff]
    %v762 = vld [vmem:[%s748 + $0x1e8] sm:$0x1]
    %v763 = vld [vmem:[%s748 + $0x230] sm:$0xff]
    %v764 = vld [vmem:[%s748 + $0x238] sm:$0x1]
    %v765 = vmax.f32 %v749, 0.0
    %v766 = vmax.f32 %v750, 0.0
    %v767 = vmax.f32 %v751, 0.0
    %v768 = vmax.f32 %v752, 0.0
    %v769 = vmax.f32 %v753, 0.0
    %v770 = vmax.f32 %v754, 0.0
    %v771 = vmax.f32 %v755, 0.0
    %v772 = vmax.f32 %v756, 0.0
    %v773 = vmax.f32 %v757, 0.0
    %v774 = vmax.f32 %v758, 0.0
    %v775 = vmax.f32 %v759, 0.0
    %v776 = vmax.f32 %v760, 0.0
    %v777 = vmax.f32 %v761, 0.0
    %v778 = vmax.f32 %v762, 0.0
    %v779 = vmax.f32 %v763, 0.0
    %v780 = vmax.f32 %v764, 0.0
    %v789 = vrot.slane %v767, 7
    %v790 = vsel %vm289, %v789, %v765
    %v791 = vrot.slane %v769, 6
    %v792 = vsel %vm292, %v791, %v790
    %v793 = vrot.slane %v771, 5
    %v794 = vsel %vm295, %v793, %v792
    %v795 = vrot.slane %v773, 4
    %v796 = vsel %vm298, %v795, %v794
    %v797 = vrot.slane %v775, 3
    %v798 = vsel %vm301, %v797, %v796
    %v799 = vrot.slane %v777, 2
    %v800 = vsel %vm304, %v799, %v798
    %v801 = vrot.slane %v779, 1
    %v802 = vsel %vm307, %v801, %v800
    %s804 = scalar_lea.vmem [#allocation2], 24
    %805 = vst.msk [vmem:[%s804] sm:$0xff] %vm310, %v802
    %v806 = vsel %vm292, %v789, %v765
    %v807 = vsel %vm295, %v791, %v806
    %v808 = vsel %vm298, %v793, %v807
    %v809 = vsel %vm301, %v795, %v808
    %v810 = vsel %vm304, %v797, %v809
    %v811 = vsel %vm307, %v799, %v810
    %s814 = scalar_lea.vmem [#allocation2], 64
    %815 = vst.msk [vmem:[%s814 - $0x1] sm:$0xfe] %vm321, %v811
    %816 = vst.msk [vmem:[%s814 + $0x7] sm:$0x1] %vm323, %v801
    %v817 = vsel %vm295, %v789, %v765
    %v818 = vsel %vm298, %v791, %v817
    %v819 = vsel %vm301, %v793, %v818
    %v820 = vsel %vm304, %v795, %v819
    %v821 = vsel %vm307, %v797, %v820
    %v822 = vsel %vm289, %v801, %v799
    %s825 = scalar_lea.vmem [#allocation2], 104
    %826 = vst.msk [vmem:[%s825 - $0x2] sm:$0xfc] %vm334, %v821
    %827 = vst.msk [vmem:[%s825 + $0x6] sm:$0x3] %vm336, %v822
    %v828 = vsel %vm298, %v789, %v765
    %v829 = vsel %vm301, %v791, %v828
    %v830 = vsel %vm304, %v793, %v829
    %v831 = vsel %vm307, %v795, %v830
    %v832 = vsel %vm289, %v799, %v797
    %v833 = vsel %vm292, %v801, %v832
    %s836 = scalar_lea.vmem [#allocation2], 144
    %837 = vst.msk [vmem:[%s836 - $0x3] sm:$0xf8] %vm347, %v831
    %838 = vst.msk [vmem:[%s836 + $0x5] sm:$0x7] %vm349, %v833
    %v839 = vsel %vm301, %v789, %v765
    %v840 = vsel %vm304, %v791, %v839
    %v841 = vsel %vm307, %v793, %v840
    %v842 = vsel %vm289, %v797, %v795
    %v843 = vsel %vm292, %v799, %v842
    %v844 = vsel %vm295, %v801, %v843
    %s847 = scalar_lea.vmem [#allocation2], 184
    %848 = vst.msk [vmem:[%s847 - $0x4] sm:$0xf0] %vm360, %v841
    %849 = vst.msk [vmem:[%s847 + $0x4] sm:$0xf] %vm362, %v844
    %v850 = vsel %vm304, %v789, %v765
    %v851 = vsel %vm307, %v791, %v850
    %v852 = vsel %vm289, %v795, %v793
    %v853 = vsel %vm292, %v797, %v852
    %v854 = vsel %vm295, %v799, %v853
    %v855 = vsel %vm298, %v801, %v854
    %s858 = scalar_lea.vmem [#allocation2], 224
    %859 = vst.msk [vmem:[%s858 - $0x5] sm:$0xe0] %vm373, %v851
    %860 = vst.msk [vmem:[%s858 + $0x3] sm:$0x1f] %vm375, %v855
    %v861 = vsel %vm307, %v789, %v765
    %v862 = vsel %vm289, %v793, %v791
    %v863 = vsel %vm292, %v795, %v862
    %v864 = vsel %vm295, %v797, %v863
    %v865 = vsel %vm298, %v799, %v864
    %v866 = vsel %vm301, %v801, %v865
    %s869 = scalar_lea.vmem [#allocation2], 264
    %870 = vst.msk [vmem:[%s869 - $0x6] sm:$0xc0] %vm386, %v861
    %871 = vst.msk [vmem:[%s869 + $0x2] sm:$0x3f] %vm388, %v866
    %v872 = vsel %vm289, %v791, %v789
    %v873 = vsel %vm292, %v793, %v872
    %v874 = vsel %vm295, %v795, %v873
    %v875 = vsel %vm298, %v797, %v874
    %v876 = vsel %vm301, %v799, %v875
    %v877 = vsel %vm304, %v801, %v876
    %s880 = scalar_lea.vmem [#allocation2], 304
    %881 = vst.msk [vmem:[%s880 - $0x7] sm:$0x80] %vm399, %v765
    %882 = vst.msk [vmem:[%s880 + $0x1] sm:$0x7f] %vm401, %v877
    %v891 = vrot.slane %v768, 7
    %v892 = vsel %vm289, %v891, %v766
    %v893 = vrot.slane %v770, 6
    %v894 = vsel %vm292, %v893, %v892
    %v895 = vrot.slane %v772, 5
    %v896 = vsel %vm295, %v895, %v894
    %v897 = vrot.slane %v774, 4
    %v898 = vsel %vm298, %v897, %v896
    %v899 = vrot.slane %v776, 3
    %v900 = vsel %vm301, %v899, %v898
    %v901 = vrot.slane %v778, 2
    %v902 = vsel %vm304, %v901, %v900
    %v903 = vrot.slane %v780, 1
    %v904 = vsel %vm307, %v903, %v902
    %s906 = scalar_lea.vmem [#allocation2], 344
    %907 = vst.msk [vmem:[%s906] sm:$0xff] %vm310, %v904
    %s908 = scalar_lea.vmem %s2, 64
    %v909 = vld [vmem:[%s908] sm:$0xff]
    %v910 = vld [vmem:[%s908 + $0x8] sm:$0x1]
    %v911 = vld [vmem:[%s908 + $0x50] sm:$0xff]
    %v912 = vld [vmem:[%s908 + $0x58] sm:$0x1]
    %v913 = vld [vmem:[%s908 + $0xa0] sm:$0xff]
    %v914 = vld [vmem:[%s908 + $0xa8] sm:$0x1]
    %v915 = vld [vmem:[%s908 + $0xf0] sm:$0xff]
    %v916 = vld [vmem:[%s908 + $0xf8] sm:$0x1]
    %v917 = vld [vmem:[%s908 + $0x140] sm:$0xff]
    %v918 = vld [vmem:[%s908 + $0x148] sm:$0x1]
    %v919 = vld [vmem:[%s908 + $0x190] sm:$0xff]
    %v920 = vld [vmem:[%s908 + $0x198] sm:$0x1]
    %v921 = vld [vmem:[%s908 + $0x1e0] sm:$0xff]
    %v922 = vld [vmem:[%s908 + $0x1e8] sm:$0x1]
    %v923 = vld [vmem:[%s908 + $0x230] sm:$0xff]
    %v924 = vld [vmem:[%s908 + $0x238] sm:$0x1]
    %v925 = vmax.f32 %v909, 0.0
    %v926 = vmax.f32 %v910, 0.0
    %v927 = vmax.f32 %v911, 0.0
    %v928 = vmax.f32 %v912, 0.0
    %v929 = vmax.f32 %v913, 0.0
    %v930 = vmax.f32 %v914, 0.0
    %v931 = vmax.f32 %v915, 0.0
    %v932 = vmax.f32 %v916, 0.0
    %v933 = vmax.f32 %v917, 0.0
    %v934 = vmax.f32 %v918, 0.0
    %v935 = vmax.f32 %v919, 0.0
    %v936 = vmax.f32 %v920, 0.0
    %v937 = vmax.f32 %v921, 0.0
    %v938 = vmax.f32 %v922, 0.0
    %v939 = vmax.f32 %v923, 0.0
    %v940 = vmax.f32 %v924, 0.0
    %v949 = vrot.slane %v927, 7
    %v950 = vsel %vm289, %v949, %v925
    %v951 = vrot.slane %v929, 6
    %v952 = vsel %vm292, %v951, %v950
    %v953 = vrot.slane %v931, 5
    %v954 = vsel %vm295, %v953, %v952
    %v955 = vrot.slane %v933, 4
    %v956 = vsel %vm298, %v955, %v954
    %v957 = vrot.slane %v935, 3
    %v958 = vsel %vm301, %v957, %v956
    %v959 = vrot.slane %v937, 2
    %v960 = vsel %vm304, %v959, %v958
    %v961 = vrot.slane %v939, 1
    %v962 = vsel %vm307, %v961, %v960
    %s964 = scalar_lea.vmem [#allocation2], 32
    %965 = vst.msk [vmem:[%s964] sm:$0xff] %vm310, %v962
    %v966 = vsel %vm292, %v949, %v925
    %v967 = vsel %vm295, %v951, %v966
    %v968 = vsel %vm298, %v953, %v967
    %v969 = vsel %vm301, %v955, %v968
    %v970 = vsel %vm304, %v957, %v969
    %v971 = vsel %vm307, %v959, %v970
    %s974 = scalar_lea.vmem [#allocation2], 72
    %975 = vst.msk [vmem:[%s974 - $0x1] sm:$0xfe] %vm321, %v971
    %976 = vst.msk [vmem:[%s974 + $0x7] sm:$0x1] %vm323, %v961
    %v977 = vsel %vm295, %v949, %v925
    %v978 = vsel %vm298, %v951, %v977
    %v979 = vsel %vm301, %v953, %v978
    %v980 = vsel %vm304, %v955, %v979
    %v981 = vsel %vm307, %v957, %v980
    %v982 = vsel %vm289, %v961, %v959
    %s985 = scalar_lea.vmem [#allocation2], 112
    %986 = vst.msk [vmem:[%s985 - $0x2] sm:$0xfc] %vm334, %v981
    %987 = vst.msk [vmem:[%s985 + $0x6] sm:$0x3] %vm336, %v982
    %v988 = vsel %vm298, %v949, %v925
    %v989 = vsel %vm301, %v951, %v988
    %v990 = vsel %vm304, %v953, %v989
    %v991 = vsel %vm307, %v955, %v990
    %v992 = vsel %vm289, %v959, %v957
    %v993 = vsel %vm292, %v961, %v992
    %s996 = scalar_lea.vmem [#allocation2], 152
    %997 = vst.msk [vmem:[%s996 - $0x3] sm:$0xf8] %vm347, %v991
    %998 = vst.msk [vmem:[%s996 + $0x5] sm:$0x7] %vm349, %v993
    %v999 = vsel %vm301, %v949, %v925
    %v1000 = vsel %vm304, %v951, %v999
    %v1001 = vsel %vm307, %v953, %v1000
    %v1002 = vsel %vm289, %v957, %v955
    %v1003 = vsel %vm292, %v959, %v1002
    %v1004 = vsel %vm295, %v961, %v1003
    %s1007 = scalar_lea.vmem [#allocation2], 192
    %1008 = vst.msk [vmem:[%s1007 - $0x4] sm:$0xf0] %vm360, %v1001
    %1009 = vst.msk [vmem:[%s1007 + $0x4] sm:$0xf] %vm362, %v1004
    %v1010 = vsel %vm304, %v949, %v925
    %v1011 = vsel %vm307, %v951, %v1010
    %v1012 = vsel %vm289, %v955, %v953
    %v1013 = vsel %vm292, %v957, %v1012
    %v1014 = vsel %vm295, %v959, %v1013
    %v1015 = vsel %vm298, %v961, %v1014
    %s1018 = scalar_lea.vmem [#allocation2], 232
    %1019 = vst.msk [vmem:[%s1018 - $0x5] sm:$0xe0] %vm373, %v1011
    %1020 = vst.msk [vmem:[%s1018 + $0x3] sm:$0x1f] %vm375, %v1015
    %v1021 = vsel %vm307, %v949, %v925
    %v1022 = vsel %vm289, %v953, %v951
    %v1023 = vsel %vm292, %v955, %v1022
    %v1024 = vsel %vm295, %v957, %v1023
    %v1025 = vsel %vm298, %v959, %v1024
    %v1026 = vsel %vm301, %v961, %v1025
    %s1029 = scalar_lea.vmem [#allocation2], 272
    %1030 = vst.msk [vmem:[%s1029 - $0x6] sm:$0xc0] %vm386, %v1021
    %1031 = vst.msk [vmem:[%s1029 + $0x2] sm:$0x3f] %vm388, %v1026
    %v1032 = vsel %vm289, %v951, %v949
    %v1033 = vsel %vm292, %v953, %v1032
    %v1034 = vsel %vm295, %v955, %v1033
    %v1035 = vsel %vm298, %v957, %v1034
    %v1036 = vsel %vm301, %v959, %v1035
    %v1037 = vsel %vm304, %v961, %v1036
    %s1040 = scalar_lea.vmem [#allocation2], 312
    %1041 = vst.msk [vmem:[%s1040 - $0x7] sm:$0x80] %vm399, %v925
    %1042 = vst.msk [vmem:[%s1040 + $0x1] sm:$0x7f] %vm401, %v1037
    %v1051 = vrot.slane %v928, 7
    %v1052 = vsel %vm289, %v1051, %v926
    %v1053 = vrot.slane %v930, 6
    %v1054 = vsel %vm292, %v1053, %v1052
    %v1055 = vrot.slane %v932, 5
    %v1056 = vsel %vm295, %v1055, %v1054
    %v1057 = vrot.slane %v934, 4
    %v1058 = vsel %vm298, %v1057, %v1056
    %v1059 = vrot.slane %v936, 3
    %v1060 = vsel %vm301, %v1059, %v1058
    %v1061 = vrot.slane %v938, 2
    %v1062 = vsel %vm304, %v1061, %v1060
    %v1063 = vrot.slane %v940, 1
    %v1064 = vsel %vm307, %v1063, %v1062
    %s1066 = scalar_lea.vmem [#allocation2], 352
    %1067 = vst.msk [vmem:[%s1066] sm:$0xff] %vm310, %v1064
    // Predicated region
    $region14: #{tpu_custom_call.1} parent=1 // pred_check
      _
    $region15: #{tpu_custom_call.1} parent=1 // pred_check_branch
      %1069 = sbr.rel (0) target = $region17
    $region16: #{tpu_custom_call.1} parent=1 // pred_region
      _
    $region17: #{tpu_custom_call.1} parent=1 // pred_fallthru
      _
    // Predicated region
    $region18: #{tpu_custom_call.1} parent=1 // pred_check
      _
    $region19: #{tpu_custom_call.1} parent=1 // pred_check_branch
      %1071 = sbr.rel (0) target = $region21
    $region20: #{tpu_custom_call.1} parent=1 // pred_region
      _
    $region21: #{tpu_custom_call.1} parent=1 // pred_fallthru
      _
    // Predicated region
    $region22: #{tpu_custom_call.1} parent=1 // pred_check
      _
    $region23: #{tpu_custom_call.1} parent=1 // pred_check_branch
      %1073 = sbr.rel (0) target = $region25
    $region24: #{tpu_custom_call.1} parent=1 // pred_region
      %s1075 = ssub.s32 5760, 5760
      %1076 = vsyncadd [#allocation3], %s1075
      %s1077 = sshll.u32 [#allocation2], 4
      %s1078 = int_to_ptr.vmem [resolvable:$true] %s1077
      %1083 = dma.vmem_to_hbm [thread:$0]  %s1078, 5760, %s5, [#allocation3], 128, 128, 8
    $region25: #{tpu_custom_call.1} parent=1 // pred_fallthru
      _
    // Predicated region
    $region26: #{tpu_custom_call.1} parent=1 // pred_check
      _
    $region27: #{tpu_custom_call.1} parent=1 // pred_check_branch
      %1085 = sbr.rel (0) target = $region29
    $region28: #{tpu_custom_call.1} parent=1 // pred_region
      _
    $region29: #{tpu_custom_call.1} parent=1 // pred_fallthru
      _
    // Predicated region
    $region30: #{tpu_custom_call.1} parent=1 // pred_check
      _
    $region31: #{tpu_custom_call.1} parent=1 // pred_check_branch
      %1087 = sbr.rel (0) target = $region33
    $region32: #{tpu_custom_call.1} parent=1 // pred_region
      _
    $region33: #{tpu_custom_call.1} parent=1 // pred_fallthru
      _
    // Predicated region
    $region34: #{tpu_custom_call.1} parent=1 // pred_check
      _
    $region35: #{tpu_custom_call.1} parent=1 // pred_check_branch
      %1089 = sbr.rel (0) target = $region37
    $region36: #{tpu_custom_call.1} parent=1 // pred_region
      %1090 = dma.done [#allocation3], 5760
    $region37: #{tpu_custom_call.1} parent=1 // pred_fallthru
      _
    %1091 = vsyncpa [#allocation3], 1

</llo_original>
